<compile_context>
chip_gen: v7x
topology: tpu7x:2x2x1
jax: 0.10.0
libtpu: 0.0.40
codegen_flags: <defaults>
</compile_context>

<pallas_src>
import jax
import jax.numpy as jnp
from jax.experimental import pallas as pl
from jax.experimental.pallas import tpu as pltpu


def _hole_kernel(es_ref, eo_ref, rp_ref, ys_ref,
                 score_ref, loss_ref, fs_ref, rgrad_ref):
    """One (D, TB) batch tile: batch on lanes, embedding dim on sublanes."""
    es = es_ref[...]                       # (D, TB)  E[ss]^T tile
    eo = eo_ref[...]                       # (D, TB)  E[os]^T tile
    rp = rp_ref[...]                       # (D, TB)  R[ps]^T tile
    ys = ys_ref[...]                       # (1, TB)  labels (+/-1)
    d = es.shape[0]

    # ccorr(a, b)[k, n] = sum_i a[i, n] * b[(i + k) % D, n].
    # Accumulate form over the reduction index i: a doubled copy of eo makes
    # each term a contiguous (D, TB) window, so the whole correlation is D
    # VPU multiply-adds into ONE (D, TB) accumulator -- no per-shift
    # cross-lane reduction and no D-way concatenation of columns.
    eo2 = jnp.concatenate([eo, eo], axis=0)            # (2D, TB)
    c = es[0:1, :] * eo2[0:d, :]
    for i in range(1, d):                              # static unroll: small D
        c = c + es[i:i + 1, :] * eo2[i:i + d, :]
    # TODO(synk): for large D (>=128) replace the static unroll with a lax.fori_loop over a VMEM scratch, or the rfft/irfft identity done in XLA.

    # _scores: reduce over the embedding dim (single cross-sublane reduction).
    score = jnp.sum(rp * c, axis=0, keepdims=True)     # (1, TB), lane-dense
    score_ref[...] = score

    # fs = -(y * sigmoid(-yscores))
    fs = -(ys * jax.nn.sigmoid(-score))                # (1, TB)
    fs_ref[...] = fs

    # per-example relation-gradient contribution: fs * ccorr(E[ss], E[os])
    rgrad_ref[...] = fs * c                            # (D, TB)

    # SoftMarginLoss terms: numerically stable softplus(-y * score).
    x = -ys * score
    loss_ref[...] = jnp.maximum(x, 0.0) + jnp.log1p(jnp.exp(-jnp.abs(x)))


def weighted_hole_forward(E, R, ss, ps, os_, ys, *, tb=None):
    """One minibatch of the WeightedHolE forward (scores / loss / grad factors)."""
    # Glue: embedding gathers + transpose into the batch-on-lanes layout.
    # TODO(synk): fuse the gathers into the kernel via PrefetchScalarGridSpec + manual DMA gather from E/R kept in pl.ANY to avoid the extra HBM round trip.
    es_t = jnp.asarray(E, jnp.float32)[ss].T           # (D, B)
    eo_t = jnp.asarray(E, jnp.float32)[os_].T          # (D, B)
    rp_t = jnp.asarray(R, jnp.float32)[ps].T           # (D, B)
    d, b = es_t.shape
    ys2 = jnp.asarray(ys, jnp.float32).reshape(1, b)   # (1, B)

    if tb is None:                                     # lanes per grid step
        tb = b if b <= 512 else 512
    assert b % tb == 0, (b, tb)
    assert tb == b or tb % 128 == 0, "batch tile should be lane-dense"

    tile_dt = pl.BlockSpec((d, tb), lambda i: (0, i))
    tile_1t = pl.BlockSpec((1, tb), lambda i: (0, i))

    out_shapes = (
        jax.ShapeDtypeStruct((1, b), jnp.float32),     # yscores
        jax.ShapeDtypeStruct((1, b), jnp.float32),     # per-example loss terms
        jax.ShapeDtypeStruct((1, b), jnp.float32),     # fs
        jax.ShapeDtypeStruct((d, b), jnp.float32),     # (fs * ccorr)^T
    )
    scores, lterms, fs, rgrad_t = pl.pallas_call(
        _hole_kernel,
        out_shape=out_shapes,
        grid=(b // tb,),
        in_specs=[tile_dt, tile_dt, tile_dt, tile_1t],
        out_specs=(tile_1t, tile_1t, tile_1t, tile_dt),
        compiler_params=pltpu.CompilerParams(
            # No cross-step state -> batch grid is fully parallel (uses both
            # TensorCores on v7x).  Explicit VMEM budget: above v5e's 16 MiB
            # scoped default, within v7x's 64 MiB physical VMEM.
            dimension_semantics=("parallel",),
            vmem_limit_bytes=32 * 1024 * 1024,
        ),
    )(es_t, eo_t, rp_t, ys2)

    loss = jnp.sum(lterms)                             # SoftMarginLoss('sum')
    return scores[0], loss, fs[0], rgrad_t.T


# ------------------------- pure-JAX reference -------------------------------
def _ccorr_ref(a, b):
    d = a.shape[-1]
    return jnp.stack(
        [jnp.sum(a * jnp.roll(b, -k, axis=-1), axis=-1) for k in range(d)],
        axis=-1)


def _forward_ref(E, R, ss, ps, os_, ys):
    c = _ccorr_ref(E[ss], E[os_])
    score = jnp.sum(R[ps] * c, axis=1)
    x = -ys * score
    loss = jnp.sum(jnp.maximum(x, 0.0) + jnp.log1p(jnp.exp(-jnp.abs(x))))
    fs = -(ys * jax.nn.sigmoid(-score))
    return score, loss, fs, fs[:, None] * c


# TODO(synk): the epoch/minibatch training generator, grad_sum_matrix sparse scatter of entity/relation gradients (incl. the cconv entity-grad path) and the Adagrad update stay as host/JAX glue.

if __name__ == "__main__":
    n_entities, n_relations, embed_dim, batch = 64, 16, 32, 256

    key = jax.random.PRNGKey(0)
    k_e, k_r, k_s, k_p, k_o, k_y = jax.random.split(key, 6)

    # deterministic init mirroring nn.Parameter(...).uniform_(-0.1, 0.1)
    E = jax.random.uniform(k_e, (n_entities, embed_dim), jnp.float32, -0.1, 0.1)
    R = jax.random.uniform(k_r, (n_relations, embed_dim), jnp.float32, -0.1, 0.1)

    ss = jax.random.randint(k_s, (batch,), 0, n_entities)
    ps = jax.random.randint(k_p, (batch,), 0, n_relations)
    os_ = jax.random.randint(k_o, (batch,), 0, n_entities)
    ys = (2.0 * jax.random.bernoulli(k_y, 0.5, (batch,)) - 1.0).astype(jnp.float32)

    scores, loss, fs, rgrad = weighted_hole_forward(E, R, ss, ps, os_, ys, tb=128)
    jax.block_until_ready((scores, loss, fs, rgrad))

    ref_scores, ref_loss, ref_fs, ref_rgrad = _forward_ref(E, R, ss, ps, os_, ys)
    assert jnp.allclose(scores, ref_scores, atol=1e-5, rtol=1e-5)
    assert jnp.allclose(loss, ref_loss, atol=1e-3, rtol=1e-5)
    assert jnp.allclose(fs, ref_fs, atol=1e-5, rtol=1e-5)
    assert jnp.allclose(rgrad, ref_rgrad, atol=1e-5, rtol=1e-5)

    print("KERNEL_OK")
</pallas_src>

<mosaic_0001>
module attributes {stable_mosaic.version = 11 : i64} {
  func.func @_hole_kernel(%arg0: i32, %arg1: memref<32x128xf32, #tpu.memory_space<vmem>>, %arg2: memref<32x128xf32, #tpu.memory_space<vmem>>, %arg3: memref<32x128xf32, #tpu.memory_space<vmem>>, %arg4: memref<1x128xf32, #tpu.memory_space<vmem>>, %arg5: memref<1x128xf32, #tpu.memory_space<vmem>>, %arg6: memref<1x128xf32, #tpu.memory_space<vmem>>, %arg7: memref<1x128xf32, #tpu.memory_space<vmem>>, %arg8: memref<32x128xf32, #tpu.memory_space<vmem>>) attributes {dimension_semantics = [#tpu.dimension_semantics<parallel>], iteration_bounds = array<i64: 2>, scalar_prefetch = 0 : i64, scratch_operands = 0 : i64, tpu.core_type = #tpu.core_type<tc>, window_params = [{transform_indices = @transform_0, window_bounds = array<i64: 32, 128>}, {transform_indices = @transform_1, window_bounds = array<i64: 32, 128>}, {transform_indices = @transform_2, window_bounds = array<i64: 32, 128>}, {transform_indices = @transform_3, window_bounds = array<i64: 1, 128>}, {transform_indices = @transform_4, window_bounds = array<i64: 1, 128>}, {transform_indices = @transform_5, window_bounds = array<i64: 1, 128>}, {transform_indices = @transform_6, window_bounds = array<i64: 1, 128>}, {transform_indices = @transform_7, window_bounds = array<i64: 32, 128>}]} {
    %c0 = arith.constant 0 : index
    %c0_0 = arith.constant 0 : index
    %0 = vector.load %arg1[%c0, %c0_0] : memref<32x128xf32, #tpu.memory_space<vmem>>, vector<32x128xf32>
    %c0_1 = arith.constant 0 : index
    %c0_2 = arith.constant 0 : index
    %1 = vector.load %arg2[%c0_1, %c0_2] : memref<32x128xf32, #tpu.memory_space<vmem>>, vector<32x128xf32>
    %c0_3 = arith.constant 0 : index
    %c0_4 = arith.constant 0 : index
    %2 = vector.load %arg3[%c0_3, %c0_4] : memref<32x128xf32, #tpu.memory_space<vmem>>, vector<32x128xf32>
    %c0_5 = arith.constant 0 : index
    %c0_6 = arith.constant 0 : index
    %3 = vector.load %arg4[%c0_5, %c0_6] : memref<1x128xf32, #tpu.memory_space<vmem>>, vector<1x128xf32>
    %4 = tpu.concatenate %1, %1 in 0 : vector<32x128xf32>, vector<32x128xf32> -> vector<64x128xf32>
    %5 = vector.extract_strided_slice %0 {offsets = [0, 0], sizes = [1, 128], strides = [1, 1]} : vector<32x128xf32> to vector<1x128xf32>
    %6 = vector.extract_strided_slice %4 {offsets = [0, 0], sizes = [32, 128], strides = [1, 1]} : vector<64x128xf32> to vector<32x128xf32>
    %7 = vector.broadcast %5 : vector<1x128xf32> to vector<32x128xf32>
    %8 = arith.mulf %7, %6 : vector<32x128xf32>
    %9 = vector.extract_strided_slice %0 {offsets = [1, 0], sizes = [1, 128], strides = [1, 1]} : vector<32x128xf32> to vector<1x128xf32>
    %10 = vector.extract_strided_slice %4 {offsets = [1, 0], sizes = [32, 128], strides = [1, 1]} : vector<64x128xf32> to vector<32x128xf32>
    %11 = vector.broadcast %9 : vector<1x128xf32> to vector<32x128xf32>
    %12 = arith.mulf %11, %10 : vector<32x128xf32>
    %13 = arith.addf %8, %12 : vector<32x128xf32>
    %14 = vector.extract_strided_slice %0 {offsets = [2, 0], sizes = [1, 128], strides = [1, 1]} : vector<32x128xf32> to vector<1x128xf32>
    %15 = vector.extract_strided_slice %4 {offsets = [2, 0], sizes = [32, 128], strides = [1, 1]} : vector<64x128xf32> to vector<32x128xf32>
    %16 = vector.broadcast %14 : vector<1x128xf32> to vector<32x128xf32>
    %17 = arith.mulf %16, %15 : vector<32x128xf32>
    %18 = arith.addf %13, %17 : vector<32x128xf32>
    %19 = vector.extract_strided_slice %0 {offsets = [3, 0], sizes = [1, 128], strides = [1, 1]} : vector<32x128xf32> to vector<1x128xf32>
    %20 = vector.extract_strided_slice %4 {offsets = [3, 0], sizes = [32, 128], strides = [1, 1]} : vector<64x128xf32> to vector<32x128xf32>
    %21 = vector.broadcast %19 : vector<1x128xf32> to vector<32x128xf32>
    %22 = arith.mulf %21, %20 : vector<32x128xf32>
    %23 = arith.addf %18, %22 : vector<32x128xf32>
    %24 = vector.extract_strided_slice %0 {offsets = [4, 0], sizes = [1, 128], strides = [1, 1]} : vector<32x128xf32> to vector<1x128xf32>
    %25 = vector.extract_strided_slice %4 {offsets = [4, 0], sizes = [32, 128], strides = [1, 1]} : vector<64x128xf32> to vector<32x128xf32>
    %26 = vector.broadcast %24 : vector<1x128xf32> to vector<32x128xf32>
    %27 = arith.mulf %26, %25 : vector<32x128xf32>
    %28 = arith.addf %23, %27 : vector<32x128xf32>
    %29 = vector.extract_strided_slice %0 {offsets = [5, 0], sizes = [1, 128], strides = [1, 1]} : vector<32x128xf32> to vector<1x128xf32>
    %30 = vector.extract_strided_slice %4 {offsets = [5, 0], sizes = [32, 128], strides = [1, 1]} : vector<64x128xf32> to vector<32x128xf32>
    %31 = vector.broadcast %29 : vector<1x128xf32> to vector<32x128xf32>
    %32 = arith.mulf %31, %30 : vector<32x128xf32>
    %33 = arith.addf %28, %32 : vector<32x128xf32>
    %34 = vector.extract_strided_slice %0 {offsets = [6, 0], sizes = [1, 128], strides = [1, 1]} : vector<32x128xf32> to vector<1x128xf32>
    %35 = vector.extract_strided_slice %4 {offsets = [6, 0], sizes = [32, 128], strides = [1, 1]} : vector<64x128xf32> to vector<32x128xf32>
    %36 = vector.broadcast %34 : vector<1x128xf32> to vector<32x128xf32>
    %37 = arith.mulf %36, %35 : vector<32x128xf32>
    %38 = arith.addf %33, %37 : vector<32x128xf32>
    %39 = vector.extract_strided_slice %0 {offsets = [7, 0], sizes = [1, 128], strides = [1, 1]} : vector<32x128xf32> to vector<1x128xf32>
    %40 = vector.extract_strided_slice %4 {offsets = [7, 0], sizes = [32, 128], strides = [1, 1]} : vector<64x128xf32> to vector<32x128xf32>
    %41 = vector.broadcast %39 : vector<1x128xf32> to vector<32x128xf32>
    %42 = arith.mulf %41, %40 : vector<32x128xf32>
    %43 = arith.addf %38, %42 : vector<32x128xf32>
    %44 = vector.extract_strided_slice %0 {offsets = [8, 0], sizes = [1, 128], strides = [1, 1]} : vector<32x128xf32> to vector<1x128xf32>
    %45 = vector.extract_strided_slice %4 {offsets = [8, 0], sizes = [32, 128], strides = [1, 1]} : vector<64x128xf32> to vector<32x128xf32>
    %46 = vector.broadcast %44 : vector<1x128xf32> to vector<32x128xf32>
    %47 = arith.mulf %46, %45 : vector<32x128xf32>
    %48 = arith.addf %43, %47 : vector<32x128xf32>
    %49 = vector.extract_strided_slice %0 {offsets = [9, 0], sizes = [1, 128], strides = [1, 1]} : vector<32x128xf32> to vector<1x128xf32>
    %50 = vector.extract_strided_slice %4 {offsets = [9, 0], sizes = [32, 128], strides = [1, 1]} : vector<64x128xf32> to vector<32x128xf32>
    %51 = vector.broadcast %49 : vector<1x128xf32> to vector<32x128xf32>
    %52 = arith.mulf %51, %50 : vector<32x128xf32>
    %53 = arith.addf %48, %52 : vector<32x128xf32>
    %54 = vector.extract_strided_slice %0 {offsets = [10, 0], sizes = [1, 128], strides = [1, 1]} : vector<32x128xf32> to vector<1x128xf32>
    %55 = vector.extract_strided_slice %4 {offsets = [10, 0], sizes = [32, 128], strides = [1, 1]} : vector<64x128xf32> to vector<32x128xf32>
    %56 = vector.broadcast %54 : vector<1x128xf32> to vector<32x128xf32>
    %57 = arith.mulf %56, %55 : vector<32x128xf32>
    %58 = arith.addf %53, %57 : vector<32x128xf32>
    %59 = vector.extract_strided_slice %0 {offsets = [11, 0], sizes = [1, 128], strides = [1, 1]} : vector<32x128xf32> to vector<1x128xf32>
    %60 = vector.extract_strided_slice %4 {offsets = [11, 0], sizes = [32, 128], strides = [1, 1]} : vector<64x128xf32> to vector<32x128xf32>
    %61 = vector.broadcast %59 : vector<1x128xf32> to vector<32x128xf32>
    %62 = arith.mulf %61, %60 : vector<32x128xf32>
    %63 = arith.addf %58, %62 : vector<32x128xf32>
    %64 = vector.extract_strided_slice %0 {offsets = [12, 0], sizes = [1, 128], strides = [1, 1]} : vector<32x128xf32> to vector<1x128xf32>
    %65 = vector.extract_strided_slice %4 {offsets = [12, 0], sizes = [32, 128], strides = [1, 1]} : vector<64x128xf32> to vector<32x128xf32>
    %66 = vector.broadcast %64 : vector<1x128xf32> to vector<32x128xf32>
    %67 = arith.mulf %66, %65 : vector<32x128xf32>
    %68 = arith.addf %63, %67 : vector<32x128xf32>
    %69 = vector.extract_strided_slice %0 {offsets = [13, 0], sizes = [1, 128], strides = [1, 1]} : vector<32x128xf32> to vector<1x128xf32>
    %70 = vector.extract_strided_slice %4 {offsets = [13, 0], sizes = [32, 128], strides = [1, 1]} : vector<64x128xf32> to vector<32x128xf32>
    %71 = vector.broadcast %69 : vector<1x128xf32> to vector<32x128xf32>
    %72 = arith.mulf %71, %70 : vector<32x128xf32>
    %73 = arith.addf %68, %72 : vector<32x128xf32>
    %74 = vector.extract_strided_slice %0 {offsets = [14, 0], sizes = [1, 128], strides = [1, 1]} : vector<32x128xf32> to vector<1x128xf32>
    %75 = vector.extract_strided_slice %4 {offsets = [14, 0], sizes = [32, 128], strides = [1, 1]} : vector<64x128xf32> to vector<32x128xf32>
    %76 = vector.broadcast %74 : vector<1x128xf32> to vector<32x128xf32>
    %77 = arith.mulf %76, %75 : vector<32x128xf32>
    %78 = arith.addf %73, %77 : vector<32x128xf32>
    %79 = vector.extract_strided_slice %0 {offsets = [15, 0], sizes = [1, 128], strides = [1, 1]} : vector<32x128xf32> to vector<1x128xf32>
    %80 = vector.extract_strided_slice %4 {offsets = [15, 0], sizes = [32, 128], strides = [1, 1]} : vector<64x128xf32> to vector<32x128xf32>
    %81 = vector.broadcast %79 : vector<1x128xf32> to vector<32x128xf32>
    %82 = arith.mulf %81, %80 : vector<32x128xf32>
    %83 = arith.addf %78, %82 : vector<32x128xf32>
    %84 = vector.extract_strided_slice %0 {offsets = [16, 0], sizes = [1, 128], strides = [1, 1]} : vector<32x128xf32> to vector<1x128xf32>
    %85 = vector.extract_strided_slice %4 {offsets = [16, 0], sizes = [32, 128], strides = [1, 1]} : vector<64x128xf32> to vector<32x128xf32>
    %86 = vector.broadcast %84 : vector<1x128xf32> to vector<32x128xf32>
    %87 = arith.mulf %86, %85 : vector<32x128xf32>
    %88 = arith.addf %83, %87 : vector<32x128xf32>
    %89 = vector.extract_strided_slice %0 {offsets = [17, 0], sizes = [1, 128], strides = [1, 1]} : vector<32x128xf32> to vector<1x128xf32>
    %90 = vector.extract_strided_slice %4 {offsets = [17, 0], sizes = [32, 128], strides = [1, 1]} : vector<64x128xf32> to vector<32x128xf32>
    %91 = vector.broadcast %89 : vector<1x128xf32> to vector<32x128xf32>
    %92 = arith.mulf %91, %90 : vector<32x128xf32>
    %93 = arith.addf %88, %92 : vector<32x128xf32>
    %94 = vector.extract_strided_slice %0 {offsets = [18, 0], sizes = [1, 128], strides = [1, 1]} : vector<32x128xf32> to vector<1x128xf32>
    %95 = vector.extract_strided_slice %4 {offsets = [18, 0], sizes = [32, 128], strides = [1, 1]} : vector<64x128xf32> to vector<32x128xf32>
    %96 = vector.broadcast %94 : vector<1x128xf32> to vector<32x128xf32>
    %97 = arith.mulf %96, %95 : vector<32x128xf32>
    %98 = arith.addf %93, %97 : vector<32x128xf32>
    %99 = vector.extract_strided_slice %0 {offsets = [19, 0], sizes = [1, 128], strides = [1, 1]} : vector<32x128xf32> to vector<1x128xf32>
    %100 = vector.extract_strided_slice %4 {offsets = [19, 0], sizes = [32, 128], strides = [1, 1]} : vector<64x128xf32> to vector<32x128xf32>
    %101 = vector.broadcast %99 : vector<1x128xf32> to vector<32x128xf32>
    %102 = arith.mulf %101, %100 : vector<32x128xf32>
    %103 = arith.addf %98, %102 : vector<32x128xf32>
    %104 = vector.extract_strided_slice %0 {offsets = [20, 0], sizes = [1, 128], strides = [1, 1]} : vector<32x128xf32> to vector<1x128xf32>
    %105 = vector.extract_strided_slice %4 {offsets = [20, 0], sizes = [32, 128], strides = [1, 1]} : vector<64x128xf32> to vector<32x128xf32>
    %106 = vector.broadcast %104 : vector<1x128xf32> to vector<32x128xf32>
    %107 = arith.mulf %106, %105 : vector<32x128xf32>
    %108 = arith.addf %103, %107 : vector<32x128xf32>
    %109 = vector.extract_strided_slice %0 {offsets = [21, 0], sizes = [1, 128], strides = [1, 1]} : vector<32x128xf32> to vector<1x128xf32>
    %110 = vector.extract_strided_slice %4 {offsets = [21, 0], sizes = [32, 128], strides = [1, 1]} : vector<64x128xf32> to vector<32x128xf32>
    %111 = vector.broadcast %109 : vector<1x128xf32> to vector<32x128xf32>
    %112 = arith.mulf %111, %110 : vector<32x128xf32>
    %113 = arith.addf %108, %112 : vector<32x128xf32>
    %114 = vector.extract_strided_slice %0 {offsets = [22, 0], sizes = [1, 128], strides = [1, 1]} : vector<32x128xf32> to vector<1x128xf32>
    %115 = vector.extract_strided_slice %4 {offsets = [22, 0], sizes = [32, 128], strides = [1, 1]} : vector<64x128xf32> to vector<32x128xf32>
    %116 = vector.broadcast %114 : vector<1x128xf32> to vector<32x128xf32>
    %117 = arith.mulf %116, %115 : vector<32x128xf32>
    %118 = arith.addf %113, %117 : vector<32x128xf32>
    %119 = vector.extract_strided_slice %0 {offsets = [23, 0], sizes = [1, 128], strides = [1, 1]} : vector<32x128xf32> to vector<1x128xf32>
    %120 = vector.extract_strided_slice %4 {offsets = [23, 0], sizes = [32, 128], strides = [1, 1]} : vector<64x128xf32> to vector<32x128xf32>
    %121 = vector.broadcast %119 : vector<1x128xf32> to vector<32x128xf32>
    %122 = arith.mulf %121, %120 : vector<32x128xf32>
    %123 = arith.addf %118, %122 : vector<32x128xf32>
    %124 = vector.extract_strided_slice %0 {offsets = [24, 0], sizes = [1, 128], strides = [1, 1]} : vector<32x128xf32> to vector<1x128xf32>
    %125 = vector.extract_strided_slice %4 {offsets = [24, 0], sizes = [32, 128], strides = [1, 1]} : vector<64x128xf32> to vector<32x128xf32>
    %126 = vector.broadcast %124 : vector<1x128xf32> to vector<32x128xf32>
    %127 = arith.mulf %126, %125 : vector<32x128xf32>
    %128 = arith.addf %123, %127 : vector<32x128xf32>
    %129 = vector.extract_strided_slice %0 {offsets = [25, 0], sizes = [1, 128], strides = [1, 1]} : vector<32x128xf32> to vector<1x128xf32>
    %130 = vector.extract_strided_slice %4 {offsets = [25, 0], sizes = [32, 128], strides = [1, 1]} : vector<64x128xf32> to vector<32x128xf32>
    %131 = vector.broadcast %129 : vector<1x128xf32> to vector<32x128xf32>
    %132 = arith.mulf %131, %130 : vector<32x128xf32>
    %133 = arith.addf %128, %132 : vector<32x128xf32>
    %134 = vector.extract_strided_slice %0 {offsets = [26, 0], sizes = [1, 128], strides = [1, 1]} : vector<32x128xf32> to vector<1x128xf32>
    %135 = vector.extract_strided_slice %4 {offsets = [26, 0], sizes = [32, 128], strides = [1, 1]} : vector<64x128xf32> to vector<32x128xf32>
    %136 = vector.broadcast %134 : vector<1x128xf32> to vector<32x128xf32>
    %137 = arith.mulf %136, %135 : vector<32x128xf32>
    %138 = arith.addf %133, %137 : vector<32x128xf32>
    %139 = vector.extract_strided_slice %0 {offsets = [27, 0], sizes = [1, 128], strides = [1, 1]} : vector<32x128xf32> to vector<1x128xf32>
    %140 = vector.extract_strided_slice %4 {offsets = [27, 0], sizes = [32, 128], strides = [1, 1]} : vector<64x128xf32> to vector<32x128xf32>
    %141 = vector.broadcast %139 : vector<1x128xf32> to vector<32x128xf32>
    %142 = arith.mulf %141, %140 : vector<32x128xf32>
    %143 = arith.addf %138, %142 : vector<32x128xf32>
    %144 = vector.extract_strided_slice %0 {offsets = [28, 0], sizes = [1, 128], strides = [1, 1]} : vector<32x128xf32> to vector<1x128xf32>
    %145 = vector.extract_strided_slice %4 {offsets = [28, 0], sizes = [32, 128], strides = [1, 1]} : vector<64x128xf32> to vector<32x128xf32>
    %146 = vector.broadcast %144 : vector<1x128xf32> to vector<32x128xf32>
    %147 = arith.mulf %146, %145 : vector<32x128xf32>
    %148 = arith.addf %143, %147 : vector<32x128xf32>
    %149 = vector.extract_strided_slice %0 {offsets = [29, 0], sizes = [1, 128], strides = [1, 1]} : vector<32x128xf32> to vector<1x128xf32>
    %150 = vector.extract_strided_slice %4 {offsets = [29, 0], sizes = [32, 128], strides = [1, 1]} : vector<64x128xf32> to vector<32x128xf32>
    %151 = vector.broadcast %149 : vector<1x128xf32> to vector<32x128xf32>
    %152 = arith.mulf %151, %150 : vector<32x128xf32>
    %153 = arith.addf %148, %152 : vector<32x128xf32>
    %154 = vector.extract_strided_slice %0 {offsets = [30, 0], sizes = [1, 128], strides = [1, 1]} : vector<32x128xf32> to vector<1x128xf32>
    %155 = vector.extract_strided_slice %4 {offsets = [30, 0], sizes = [32, 128], strides = [1, 1]} : vector<64x128xf32> to vector<32x128xf32>
    %156 = vector.broadcast %154 : vector<1x128xf32> to vector<32x128xf32>
    %157 = arith.mulf %156, %155 : vector<32x128xf32>
    %158 = arith.addf %153, %157 : vector<32x128xf32>
    %159 = vector.extract_strided_slice %0 {offsets = [31, 0], sizes = [1, 128], strides = [1, 1]} : vector<32x128xf32> to vector<1x128xf32>
    %160 = vector.extract_strided_slice %4 {offsets = [31, 0], sizes = [32, 128], strides = [1, 1]} : vector<64x128xf32> to vector<32x128xf32>
    %161 = vector.broadcast %159 : vector<1x128xf32> to vector<32x128xf32>
    %162 = arith.mulf %161, %160 : vector<32x128xf32>
    %163 = arith.addf %158, %162 : vector<32x128xf32>
    %164 = arith.mulf %2, %163 : vector<32x128xf32>
    %cst = arith.constant dense<0.000000e+00> : vector<128xf32>
    %165 = vector.multi_reduction <add>, %164, %cst [0] : vector<32x128xf32> to vector<128xf32>
    %166 = vector.shape_cast %165 : vector<128xf32> to vector<1x128xf32>
    %c0_7 = arith.constant 0 : index
    %c0_8 = arith.constant 0 : index
    %167 = vector.load %arg5[%c0_7, %c0_8] : memref<1x128xf32, #tpu.memory_space<vmem>>, vector<1x128xf32>
    tpu.vector_store %arg5[%c0_7, %c0_8], %166 {strides = array<i32>} : memref<1x128xf32, #tpu.memory_space<vmem>>, vector<1x128xf32>,
    %cst_9 = arith.constant 0.000000e+00 : f32
    %168 = vector.broadcast %cst_9 : f32 to vector<1x128xf32>
    %169 = arith.subf %168, %166 : vector<1x128xf32>
    %170 = arith.negf %169 : vector<1x128xf32>
    %171 = math.exp %170 : vector<1x128xf32>
    %cst_10 = arith.constant 1.000000e+00 : f32
    %172 = vector.broadcast %cst_10 : f32 to vector<1x128xf32>
    %173 = arith.addf %172, %171 : vector<1x128xf32>
    %174 = arith.divf %172, %173 : vector<1x128xf32>
    %175 = arith.mulf %3, %174 : vector<1x128xf32>
    %cst_11 = arith.constant 0.000000e+00 : f32
    %176 = vector.broadcast %cst_11 : f32 to vector<1x128xf32>
    %177 = arith.subf %176, %175 : vector<1x128xf32>
    %c0_12 = arith.constant 0 : index
    %c0_13 = arith.constant 0 : index
    %178 = vector.load %arg7[%c0_12, %c0_13] : memref<1x128xf32, #tpu.memory_space<vmem>>, vector<1x128xf32>
    tpu.vector_store %arg7[%c0_12, %c0_13], %177 {strides = array<i32>} : memref<1x128xf32, #tpu.memory_space<vmem>>, vector<1x128xf32>,
    %179 = vector.broadcast %177 : vector<1x128xf32> to vector<32x128xf32>
    %180 = arith.mulf %179, %163 : vector<32x128xf32>
    %c0_14 = arith.constant 0 : index
    %c0_15 = arith.constant 0 : index
    %181 = vector.load %arg8[%c0_14, %c0_15] : memref<32x128xf32, #tpu.memory_space<vmem>>, vector<32x128xf32>
    tpu.vector_store %arg8[%c0_14, %c0_15], %180 {strides = array<i32>} : memref<32x128xf32, #tpu.memory_space<vmem>>, vector<32x128xf32>,
    %cst_16 = arith.constant 0.000000e+00 : f32
    %182 = vector.broadcast %cst_16 : f32 to vector<1x128xf32>
    %183 = arith.subf %182, %3 : vector<1x128xf32>
    %184 = arith.mulf %183, %166 : vector<1x128xf32>
    %cst_17 = arith.constant 0.000000e+00 : f32
    %185 = vector.broadcast %cst_17 : f32 to vector<1x128xf32>
    %186 = arith.maximumf %184, %185 : vector<1x128xf32>
    %187 = math.absf %184 : vector<1x128xf32>
    %cst_18 = arith.constant 0.000000e+00 : f32
    %188 = vector.broadcast %cst_18 : f32 to vector<1x128xf32>
    %189 = arith.subf %188, %187 : vector<1x128xf32>
    %190 = math.exp %189 : vector<1x128xf32>
    %191 = math.log1p %190 : vector<1x128xf32>
    %192 = arith.addf %186, %191 : vector<1x128xf32>
    %c0_19 = arith.constant 0 : index
    %c0_20 = arith.constant 0 : index
    %193 = vector.load %arg6[%c0_19, %c0_20] : memref<1x128xf32, #tpu.memory_space<vmem>>, vector<1x128xf32>
    tpu.vector_store %arg6[%c0_19, %c0_20], %192 {strides = array<i32>} : memref<1x128xf32, #tpu.memory_space<vmem>>, vector<1x128xf32>,
    return
  }
  func.func @transform_0(%arg0: i32) -> (i32, i32) {
    %c0_i32 = arith.constant 0 : i32
    %c0_i32_0 = arith.constant 0 : i32
    return %c0_i32, %arg0 : i32, i32
  }
  func.func @transform_1(%arg0: i32) -> (i32, i32) {
    %c0_i32 = arith.constant 0 : i32
    %c0_i32_0 = arith.constant 0 : i32
    return %c0_i32, %arg0 : i32, i32
  }
  func.func @transform_2(%arg0: i32) -> (i32, i32) {
    %c0_i32 = arith.constant 0 : i32
    %c0_i32_0 = arith.constant 0 : i32
    return %c0_i32, %arg0 : i32, i32
  }
  func.func @transform_3(%arg0: i32) -> (i32, i32) {
    %c0_i32 = arith.constant 0 : i32
    %c0_i32_0 = arith.constant 0 : i32
    return %c0_i32, %arg0 : i32, i32
  }
  func.func @transform_4(%arg0: i32) -> (i32, i32) {
    %c0_i32 = arith.constant 0 : i32
    %c0_i32_0 = arith.constant 0 : i32
    return %c0_i32, %arg0 : i32, i32
  }
  func.func @transform_5(%arg0: i32) -> (i32, i32) {
    %c0_i32 = arith.constant 0 : i32
    %c0_i32_0 = arith.constant 0 : i32
    return %c0_i32, %arg0 : i32, i32
  }
  func.func @transform_6(%arg0: i32) -> (i32, i32) {
    %c0_i32 = arith.constant 0 : i32
    %c0_i32_0 = arith.constant 0 : i32
    return %c0_i32, %arg0 : i32, i32
  }
  func.func @transform_7(%arg0: i32) -> (i32, i32) {
    %c0_i32 = arith.constant 0 : i32
    %c0_i32_0 = arith.constant 0 : i32
    return %c0_i32, %arg0 : i32, i32
  }
}

</mosaic_0001>

<llo_original>
// kernel: tpu_custom_call.1
$region0: #{tpu_custom_call.1}
  #allocation0 [shape = 'u32[]', space=smem, size = 0x4, offset = 0x4, fixed_abs, tag = 'smem constant byte address 0x4 - core index']
  #allocation1 [shape = 'u32[144,128]{1,0:T(1,128)}', space=vmem, size = 0x12000, scoped, tag = 'internal scratch']
  %s0 = inlined_call_operand.hbm [shape: f32[32,256], index: 0, kind: input, shape index: {}]
  %s1 = inlined_call_operand.hbm [shape: f32[32,256], index: 1, kind: input, shape index: {}]
  %s2 = inlined_call_operand.hbm [shape: f32[32,256], index: 2, kind: input, shape index: {}]
  %s3 = inlined_call_operand.vmem [shape: f32[1,256], index: 3, kind: input, shape index: {}]
  %s4 = inlined_call_operand.hbm [shape: f32[1,256], index: 4, kind: output, shape index: {0}]
  %s5 = inlined_call_operand.hbm [shape: f32[1,256], index: 5, kind: output, shape index: {1}]
  %s6 = inlined_call_operand.hbm [shape: f32[1,256], index: 6, kind: output, shape index: {2}]
  %s7 = inlined_call_operand.hbm [shape: f32[32,256], index: 7, kind: output, shape index: {3}]
  %8 = xla_tuple %s4, %s5, %s6, %s7
  %s9 = sld [smem:[#allocation0]]
  $region85: #{tpu_custom_call.1} parent=0
    _
  %s11 = ssub.s32 1, %s9
  %s12 = scalar_select 0, %s11, %s9
  $region1: #{tpu_custom_call.1} parent=0
    #allocation2 [shape = 'u8[32768]{0}', space=vmem, size = 0x8000, scoped, tag = 'input window, operand 0']
    #allocation3 [shape = 's32[2]{0}', space=sflag, size = 0x8, scoped, tag = 'scoped memory for tpu_custom_call.1']
    #allocation4 [shape = 's32[2]{0}', space=sflag, size = 0x8, scoped, tag = 'scoped memory for tpu_custom_call.1']
    #allocation5 [shape = 'u8[32768]{0}', space=vmem, size = 0x8000, scoped, tag = 'input window, operand 1']
    #allocation6 [shape = 's32[2]{0}', space=sflag, size = 0x8, scoped, tag = 'scoped memory for tpu_custom_call.1']
    #allocation7 [shape = 'u8[32768]{0}', space=vmem, size = 0x8000, scoped, tag = 'input window, operand 2']
    #allocation8 [shape = 'u8[1024]{0}', space=vmem, size = 0x400, scoped, tag = 'output window, operand 0']
    #allocation9 [shape = 'u8[1024]{0}', space=vmem, size = 0x400, scoped, tag = 'output window, operand 1']
    #allocation10 [shape = 's32[2]{0}', space=sflag, size = 0x8, scoped, tag = 'scoped memory for tpu_custom_call.1']
    #allocation11 [shape = 'u8[1024]{0}', space=vmem, size = 0x400, scoped, tag = 'output window, operand 2']
    #allocation12 [shape = 'u8[32768]{0}', space=vmem, size = 0x8000, scoped, tag = 'output window, operand 3']
    #allocation13 [shape = 's32[2]{0}', space=sflag, size = 0x8, scoped, tag = 'scoped memory for tpu_custom_call.1']
    %13 = vsyncpa [#allocation3], 0
    %s14 = scalar_lea.sflag [#allocation3], 1
    %15 = vsyncpa %s14, 0
    %16 = vsyncpa [#allocation6], 0
    %s17 = scalar_lea.sflag [#allocation6], 1
    %18 = vsyncpa %s17, 0
    %19 = vsyncpa [#allocation4], 0
    %s20 = scalar_lea.sflag [#allocation4], 1
    %21 = vsyncpa %s20, 0
    %22 = vsyncpa [#allocation10], 0
    %s23 = scalar_lea.sflag [#allocation10], 1
    %24 = vsyncpa %s23, 0
    %25 = vsyncpa [#allocation13], 0
    %s26 = scalar_lea.sflag [#allocation13], 1
    %27 = vsyncpa %s26, 0
    loop: start=0, step=1, limit=4
    $region2: #{tpu_custom_call.1} parent=1 // loop_pre_header
      _
    $region3: #{tpu_custom_call.1} parent=1 // loop_header
      %s29 = sphi 0, %s33
      %p30 = scmp.ge.s32.totalorder %s29, 4
      %s39 = sphi 0, %s41
      %s42 = sphi 0, %s39
      %s43 = sphi 0, %s42
      %s59 = sphi 0, %s43
      %s65 = sphi 0, %s67
      %s68 = sphi 0, %s65
      %s69 = sphi 0, %s68
      %s85 = sphi 0, %s69
      %s91 = sphi 0, %s93
      %s94 = sphi 0, %s91
      %s95 = sphi 0, %s94
      %s111 = sphi 0, %s95
      %s117 = sphi 0, %s119
      %s120 = sphi 0, %s117
      %s121 = sphi 0, %s120
      %s137 = sphi 0, %s121
      %s143 = sphi 0, %s145
      %s146 = sphi 0, %s143
      %s147 = sphi 0, %s146
      %s163 = sphi 0, %s147
      %s169 = sphi 0, %s171
      %s172 = sphi 0, %s169
      %s173 = sphi 0, %s172
      %s189 = sphi 0, %s173
      %s195 = sphi 0, %s197
      %s198 = sphi 0, %s195
      %s199 = sphi 0, %s198
      %s215 = sphi 0, %s199
      %s221 = sphi 0, %s223
      %s224 = sphi 0, %s221
      %s225 = sphi 0, %s224
      %s241 = sphi 0, %s225
    $region4: #{tpu_custom_call.1} parent=1 // loop_header_branch
      %32 = sbr.rel (%p30) target = $region8
    $region5: #{tpu_custom_call.1} parent=1 // loop_body
      %s34 = ssub.s32 %s29, 1
      %s35 = ssub.s32 %s29, 2
      %s36 = sadd.s32 %s29, 1
      %s37 = ssub.s32 %s29, %s36
      %p38 = scmp.eq.s32.totalorder %s37, 0
      %s40 = sadd.s32 %s39, 1
      %s41 = scalar_select %p38, %s39, %s40
      %p44 = pneg %p38
      %p45 = scmp.eq.s32.totalorder %s29, 1
      %p46 = por %p44, %p45
      %p47 = scmp.ne.s32.totalorder %s39, %s42
      %p48 = scmp.eq.s32.totalorder %s29, 0
      %p49 = por %p47, %p48
      %p50 = scmp.ne.s32.totalorder %s39, %s42
      %p51 = scmp.eq.s32.totalorder %s34, 1
      %p52 = por %p50, %p51
      %p53 = scmp.ne.s32.totalorder %s42, %s43
      %p54 = scmp.eq.s32.totalorder %s34, 0
      %p55 = por %p53, %p54
      %p56 = scmp.ne.s32.totalorder %s42, %s43
      %p57 = scmp.eq.s32.totalorder %s35, 1
      %p58 = por %p56, %p57
      %p60 = scmp.ne.s32.totalorder %s43, %s59
      %p61 = scmp.eq.s32.totalorder %s35, 0
      %p62 = por %p60, %p61
      %s63 = ssub.s32 %s29, %s36
      %p64 = scmp.eq.s32.totalorder %s63, 0
      %s66 = sadd.s32 %s65, 1
      %s67 = scalar_select %p64, %s65, %s66
      %p70 = pneg %p64
      %p71 = scmp.eq.s32.totalorder %s29, 1
      %p72 = por %p70, %p71
      %p73 = scmp.ne.s32.totalorder %s65, %s68
      %p74 = scmp.eq.s32.totalorder %s29, 0
      %p75 = por %p73, %p74
      %p76 = scmp.ne.s32.totalorder %s65, %s68
      %p77 = scmp.eq.s32.totalorder %s34, 1
      %p78 = por %p76, %p77
      %p79 = scmp.ne.s32.totalorder %s68, %s69
      %p80 = scmp.eq.s32.totalorder %s34, 0
      %p81 = por %p79, %p80
      %p82 = scmp.ne.s32.totalorder %s68, %s69
      %p83 = scmp.eq.s32.totalorder %s35, 1
      %p84 = por %p82, %p83
      %p86 = scmp.ne.s32.totalorder %s69, %s85
      %p87 = scmp.eq.s32.totalorder %s35, 0
      %p88 = por %p86, %p87
      %s89 = ssub.s32 %s29, %s36
      %p90 = scmp.eq.s32.totalorder %s89, 0
      %s92 = sadd.s32 %s91, 1
      %s93 = scalar_select %p90, %s91, %s92
      %p96 = pneg %p90
      %p97 = scmp.eq.s32.totalorder %s29, 1
      %p98 = por %p96, %p97
      %p99 = scmp.ne.s32.totalorder %s91, %s94
      %p100 = scmp.eq.s32.totalorder %s29, 0
      %p101 = por %p99, %p100
      %p102 = scmp.ne.s32.totalorder %s91, %s94
      %p103 = scmp.eq.s32.totalorder %s34, 1
      %p104 = por %p102, %p103
      %p105 = scmp.ne.s32.totalorder %s94, %s95
      %p106 = scmp.eq.s32.totalorder %s34, 0
      %p107 = por %p105, %p106
      %p108 = scmp.ne.s32.totalorder %s94, %s95
      %p109 = scmp.eq.s32.totalorder %s35, 1
      %p110 = por %p108, %p109
      %p112 = scmp.ne.s32.totalorder %s95, %s111
      %p113 = scmp.eq.s32.totalorder %s35, 0
      %p114 = por %p112, %p113
      %s115 = ssub.s32 %s29, %s36
      %p116 = scmp.eq.s32.totalorder %s115, 0
      %s118 = sadd.s32 %s117, 1
      %s119 = scalar_select %p116, %s117, %s118
      %p122 = pneg %p116
      %p123 = scmp.eq.s32.totalorder %s29, 1
      %p124 = por %p122, %p123
      %p125 = scmp.ne.s32.totalorder %s117, %s120
      %p126 = scmp.eq.s32.totalorder %s29, 0
      %p127 = por %p125, %p126
      %p128 = scmp.ne.s32.totalorder %s117, %s120
      %p129 = scmp.eq.s32.totalorder %s34, 1
      %p130 = por %p128, %p129
      %p131 = scmp.ne.s32.totalorder %s120, %s121
      %p132 = scmp.eq.s32.totalorder %s34, 0
      %p133 = por %p131, %p132
      %p134 = scmp.ne.s32.totalorder %s120, %s121
      %p135 = scmp.eq.s32.totalorder %s35, 1
      %p136 = por %p134, %p135
      %p138 = scmp.ne.s32.totalorder %s121, %s137
      %p139 = scmp.eq.s32.totalorder %s35, 0
      %p140 = por %p138, %p139
      %s141 = ssub.s32 %s29, %s36
      %p142 = scmp.eq.s32.totalorder %s141, 0
      %s144 = sadd.s32 %s143, 1
      %s145 = scalar_select %p142, %s143, %s144
      %p148 = pneg %p142
      %p149 = scmp.eq.s32.totalorder %s29, 1
      %p150 = por %p148, %p149
      %p151 = scmp.ne.s32.totalorder %s143, %s146
      %p152 = scmp.eq.s32.totalorder %s29, 0
      %p153 = por %p151, %p152
      %p154 = scmp.ne.s32.totalorder %s143, %s146
      %p155 = scmp.eq.s32.totalorder %s34, 1
      %p156 = por %p154, %p155
      %p157 = scmp.ne.s32.totalorder %s146, %s147
      %p158 = scmp.eq.s32.totalorder %s34, 0
      %p159 = por %p157, %p158
      %p160 = scmp.ne.s32.totalorder %s146, %s147
      %p161 = scmp.eq.s32.totalorder %s35, 1
      %p162 = por %p160, %p161
      %p164 = scmp.ne.s32.totalorder %s147, %s163
      %p165 = scmp.eq.s32.totalorder %s35, 0
      %p166 = por %p164, %p165
      %s167 = ssub.s32 %s29, %s36
      %p168 = scmp.eq.s32.totalorder %s167, 0
      %s170 = sadd.s32 %s169, 1
      %s171 = scalar_select %p168, %s169, %s170
      %p174 = pneg %p168
      %p175 = scmp.eq.s32.totalorder %s29, 1
      %p176 = por %p174, %p175
      %p177 = scmp.ne.s32.totalorder %s169, %s172
      %p178 = scmp.eq.s32.totalorder %s29, 0
      %p179 = por %p177, %p178
      %p180 = scmp.ne.s32.totalorder %s169, %s172
      %p181 = scmp.eq.s32.totalorder %s34, 1
      %p182 = por %p180, %p181
      %p183 = scmp.ne.s32.totalorder %s172, %s173
      %p184 = scmp.eq.s32.totalorder %s34, 0
      %p185 = por %p183, %p184
      %p186 = scmp.ne.s32.totalorder %s172, %s173
      %p187 = scmp.eq.s32.totalorder %s35, 1
      %p188 = por %p186, %p187
      %p190 = scmp.ne.s32.totalorder %s173, %s189
      %p191 = scmp.eq.s32.totalorder %s35, 0
      %p192 = por %p190, %p191
      %s193 = ssub.s32 %s29, %s36
      %p194 = scmp.eq.s32.totalorder %s193, 0
      %s196 = sadd.s32 %s195, 1
      %s197 = scalar_select %p194, %s195, %s196
      %p200 = pneg %p194
      %p201 = scmp.eq.s32.totalorder %s29, 1
      %p202 = por %p200, %p201
      %p203 = scmp.ne.s32.totalorder %s195, %s198
      %p204 = scmp.eq.s32.totalorder %s29, 0
      %p205 = por %p203, %p204
      %p206 = scmp.ne.s32.totalorder %s195, %s198
      %p207 = scmp.eq.s32.totalorder %s34, 1
      %p208 = por %p206, %p207
      %p209 = scmp.ne.s32.totalorder %s198, %s199
      %p210 = scmp.eq.s32.totalorder %s34, 0
      %p211 = por %p209, %p210
      %p212 = scmp.ne.s32.totalorder %s198, %s199
      %p213 = scmp.eq.s32.totalorder %s35, 1
      %p214 = por %p212, %p213
      %p216 = scmp.ne.s32.totalorder %s199, %s215
      %p217 = scmp.eq.s32.totalorder %s35, 0
      %p218 = por %p216, %p217
      %s219 = ssub.s32 %s29, %s36
      %p220 = scmp.eq.s32.totalorder %s219, 0
      %s222 = sadd.s32 %s221, 1
      %s223 = scalar_select %p220, %s221, %s222
      %p226 = pneg %p220
      %p227 = scmp.eq.s32.totalorder %s29, 1
      %p228 = por %p226, %p227
      %p229 = scmp.ne.s32.totalorder %s221, %s224
      %p230 = scmp.eq.s32.totalorder %s29, 0
      %p231 = por %p229, %p230
      %p232 = scmp.ne.s32.totalorder %s221, %s224
      %p233 = scmp.eq.s32.totalorder %s34, 1
      %p234 = por %p232, %p233
      %p235 = scmp.ne.s32.totalorder %s224, %s225
      %p236 = scmp.eq.s32.totalorder %s34, 0
      %p237 = por %p235, %p236
      %p238 = scmp.ne.s32.totalorder %s224, %s225
      %p239 = scmp.eq.s32.totalorder %s35, 1
      %p240 = por %p238, %p239
      %p242 = scmp.ne.s32.totalorder %s225, %s241
      %p243 = scmp.eq.s32.totalorder %s35, 0
      %p244 = por %p242, %p243
      %p245 = scmp.le.s32.totalorder 1, %s29
      %p246 = scmp.lt.s32.totalorder %s29, 3
      %p247 = pnand %p245, %p246
      %p248 = pneg %p247
      // Predicated region
      $region9: #{tpu_custom_call.1} parent=5 // pred_check
        _
      $region10: #{tpu_custom_call.1} parent=5 // pred_check_branch
        %250 = sbr.rel (%p247) target = $region12
      $region11: #{tpu_custom_call.1} parent=5 // pred_region
        %s251 = ssub.s32 %s29, 1
      $region12: #{tpu_custom_call.1} parent=5 // pred_fallthru
        _
      %p252 = scmp.lt.s32.totalorder %s29, 2
      // Predicated region
      $region13: #{tpu_custom_call.1} parent=5 // pred_check
        %p253 = pneg %p252
      $region14: #{tpu_custom_call.1} parent=5 // pred_check_branch
        %255 = sbr.rel (%p253) target = $region16
      $region15: #{tpu_custom_call.1} parent=5 // pred_region
        // Predicated region
        $region17: #{tpu_custom_call.1} parent=15 // pred_check
          %p256 = pneg %p49
        $region18: #{tpu_custom_call.1} parent=15 // pred_check_branch
          %258 = sbr.rel (%p256) target = $region20
        $region19: #{tpu_custom_call.1} parent=15 // pred_region
          %s259 = sand.u32 %s39, 1
          %s260 = scalar_lea.sflag [#allocation3], %s259
          %s261 = sand.u32 %s39, 1
          %s262 = smul.addr %s261, 32
          %s263 = scalar_lea.vmem [#allocation2], %s262
          %s265 = ssub.s32 512, 512
          %266 = vsyncadd %s260, %s265
          %s267 = smul.addr %s29, 128
          %s268 = scalar_lea.hbm %s0, %s267
          %s269 = sshll.u32 %s263, 4
          %s270 = int_to_ptr.vmem [resolvable:$true] %s269
          %275 = dma.hbm_to_vmem [thread:$0]  %s268, 512, %s270, %s260, 256, 128, 8
        $region20: #{tpu_custom_call.1} parent=15 // pred_fallthru
          _
        // Predicated region
        $region21: #{tpu_custom_call.1} parent=15 // pred_check
          %p276 = pneg %p75
        $region22: #{tpu_custom_call.1} parent=15 // pred_check_branch
          %278 = sbr.rel (%p276) target = $region24
        $region23: #{tpu_custom_call.1} parent=15 // pred_region
          %s279 = sand.u32 %s29, 1
          %s280 = scalar_lea.sflag [#allocation6], %s279
          %s281 = sand.u32 %s65, 1
          %s282 = smul.addr %s281, 32
          %s283 = scalar_lea.vmem [#allocation5], %s282
          %s285 = ssub.s32 512, 512
          %286 = vsyncadd %s280, %s285
          %s287 = smul.addr %s29, 128
          %s288 = scalar_lea.hbm %s1, %s287
          %s289 = sshll.u32 %s283, 4
          %s290 = int_to_ptr.vmem [resolvable:$true] %s289
          %295 = dma.hbm_to_vmem [thread:$0]  %s288, 512, %s290, %s280, 256, 128, 8
        $region24: #{tpu_custom_call.1} parent=15 // pred_fallthru
          _
        // Predicated region
        $region25: #{tpu_custom_call.1} parent=15 // pred_check
          %p296 = pneg %p101
        $region26: #{tpu_custom_call.1} parent=15 // pred_check_branch
          %298 = sbr.rel (%p296) target = $region28
        $region27: #{tpu_custom_call.1} parent=15 // pred_region
          %s299 = sand.u32 %s29, 1
          %s300 = scalar_lea.sflag [#allocation6], %s299
          %s301 = sand.u32 %s91, 1
          %s302 = smul.addr %s301, 32
          %s303 = scalar_lea.vmem [#allocation7], %s302
          %s305 = ssub.s32 512, 512
          %306 = vsyncadd %s300, %s305
          %s307 = smul.addr %s29, 128
          %s308 = scalar_lea.hbm %s2, %s307
          %s309 = sshll.u32 %s303, 4
          %s310 = int_to_ptr.vmem [resolvable:$true] %s309
          %315 = dma.hbm_to_vmem [thread:$0]  %s308, 512, %s310, %s300, 256, 128, 8
        $region28: #{tpu_custom_call.1} parent=15 // pred_fallthru
          _
        // Predicated region
        $region29: #{tpu_custom_call.1} parent=15 // pred_check
          %p316 = pneg %p127
        $region30: #{tpu_custom_call.1} parent=15 // pred_check_branch
          %318 = sbr.rel (%p316) target = $region32
        $region31: #{tpu_custom_call.1} parent=15 // pred_region
          %p319 = scmp.lt.s32.totalorder %s29, 1
          %s320 = scalar_select %p319, %s29, 1
          %s321 = scalar_lea.vmem %s3, %s320
        $region32: #{tpu_custom_call.1} parent=15 // pred_fallthru
          _
      $region16: #{tpu_custom_call.1} parent=5 // pred_fallthru
        _
      %p322 = scmp.le.s32.totalorder 1, %s29
      %p323 = scmp.lt.s32.totalorder %s29, 3
      %p324 = pnand %p322, %p323
      %p325 = pneg %p324
      // Predicated region
      $region33: #{tpu_custom_call.1} parent=5 // pred_check
        _
      $region34: #{tpu_custom_call.1} parent=5 // pred_check_branch
        %327 = sbr.rel (%p324) target = $region36
      $region35: #{tpu_custom_call.1} parent=5 // pred_region
        %s328 = ssub.s32 %s29, 1
        %s329 = sand.u32 %s42, 1
        %s330 = scalar_lea.sflag [#allocation3], %s329
        %s331 = sand.u32 %s42, 1
        %s332 = smul.addr %s331, 32
        %s333 = scalar_lea.vmem [#allocation2], %s332
        // Predicated region
        $region37: #{tpu_custom_call.1} parent=35 // pred_check
          %p334 = pneg %p55
        $region38: #{tpu_custom_call.1} parent=35 // pred_check_branch
          %336 = sbr.rel (%p334) target = $region40
        $region39: #{tpu_custom_call.1} parent=35 // pred_region
          %337 = dma.done %s330, 512
        $region40: #{tpu_custom_call.1} parent=35 // pred_fallthru
          _
        %s338 = sand.u32 %s34, 1
        %s339 = scalar_lea.sflag [#allocation6], %s338
        %s340 = sand.u32 %s68, 1
        %s341 = smul.addr %s340, 32
        %s342 = scalar_lea.vmem [#allocation5], %s341
        // Predicated region
        $region41: #{tpu_custom_call.1} parent=35 // pred_check
          %p343 = pneg %p81
        $region42: #{tpu_custom_call.1} parent=35 // pred_check_branch
          %345 = sbr.rel (%p343) target = $region44
        $region43: #{tpu_custom_call.1} parent=35 // pred_region
          %346 = dma.done %s339, 512
        $region44: #{tpu_custom_call.1} parent=35 // pred_fallthru
          _
        %s347 = sand.u32 %s34, 1
        %s348 = scalar_lea.sflag [#allocation6], %s347
        %s349 = sand.u32 %s94, 1
        %s350 = smul.addr %s349, 32
        %s351 = scalar_lea.vmem [#allocation7], %s350
        // Predicated region
        $region45: #{tpu_custom_call.1} parent=35 // pred_check
          %p352 = pneg %p107
        $region46: #{tpu_custom_call.1} parent=35 // pred_check_branch
          %354 = sbr.rel (%p352) target = $region48
        $region47: #{tpu_custom_call.1} parent=35 // pred_region
          %355 = dma.done %s348, 512
        $region48: #{tpu_custom_call.1} parent=35 // pred_fallthru
          _
        %s356 = sand.u32 %s42, 1
        %s357 = scalar_lea.sflag [#allocation3], %s356
        %s358 = sand.u32 %s42, 1
        %s359 = smul.addr %s358, 32
        %s360 = scalar_lea.vmem [#allocation2], %s359
        %p361 = pneg %p55
        %p362 = pneg %p52
        %s363 = sand.u32 %s34, 1
        %s364 = scalar_lea.sflag [#allocation6], %s363
        %s365 = sand.u32 %s68, 1
        %s366 = smul.addr %s365, 32
        %s367 = scalar_lea.vmem [#allocation5], %s366
        %p368 = pneg %p81
        %p369 = pneg %p78
        %s370 = sand.u32 %s34, 1
        %s371 = scalar_lea.sflag [#allocation6], %s370
        %s372 = sand.u32 %s94, 1
        %s373 = smul.addr %s372, 32
        %s374 = scalar_lea.vmem [#allocation7], %s373
        %p375 = pneg %p107
        %p376 = pneg %p104
        %p377 = scmp.lt.s32.totalorder %s34, 1
        %s378 = scalar_select %p377, %s34, 1
        %s379 = scalar_lea.vmem %s3, %s378
        %p380 = pneg %p133
        %p381 = pneg %p130
        %p382 = pneg %p159
        %p383 = pneg %p156
        %s384 = sand.u32 %s146, 1
        %s385 = scalar_lea.sflag [#allocation4], %s384
        %s386 = sand.u32 %s146, 1
        %s387 = scalar_lea.vmem [#allocation8], %s386
        %p388 = pneg %p185
        %p389 = pneg %p182
        %s390 = sand.u32 %s34, 1
        %s391 = scalar_lea.sflag [#allocation10], %s390
        %s392 = sand.u32 %s172, 1
        %s393 = scalar_lea.vmem [#allocation9], %s392
        %p394 = pneg %p211
        %p395 = pneg %p208
        %s396 = sand.u32 %s34, 1
        %s397 = scalar_lea.sflag [#allocation10], %s396
        %s398 = sand.u32 %s198, 1
        %s399 = scalar_lea.vmem [#allocation11], %s398
        %p400 = pneg %p237
        %p401 = pneg %p234
        %s402 = sand.u32 %s224, 1
        %s403 = scalar_lea.sflag [#allocation13], %s402
        %s404 = sand.u32 %s224, 1
        %s405 = smul.addr %s404, 32
        %s406 = scalar_lea.vmem [#allocation12], %s405
        %p407 = scmp.lt.s32.totalorder %s34, 1
        %s408 = scalar_select %p407, %s34, 1
        %s409 = scalar_lea.vmem %s3, %s408
        %v410 = vld [vmem:[%s333] sm:$0xff]
        %v411 = vld [vmem:[%s333 + $0x8] sm:$0xff]
        %v412 = vld [vmem:[%s333 + $0x10] sm:$0xff]
        %v413 = vld [vmem:[%s333 + $0x18] sm:$0xff]
        %v414 = vld [vmem:[%s342] sm:$0xff]
        %v415 = vld [vmem:[%s342 + $0x8] sm:$0xff]
        %v416 = vld [vmem:[%s342 + $0x10] sm:$0xff]
        %v417 = vld [vmem:[%s342 + $0x18] sm:$0xff]
        %v418 = vld [vmem:[%s351] sm:$0xff]
        %v419 = vld [vmem:[%s351 + $0x8] sm:$0xff]
        %v420 = vld [vmem:[%s351 + $0x10] sm:$0xff]
        %v421 = vld [vmem:[%s351 + $0x18] sm:$0xff]
        %v422 = vld [vmem:[%s409] sm:$0x1]
        %v423 = vlaneseq
        %v424 = vshrl.u32 %v423, 7
        %v425 = vsub.s32 0, %v424
        %v426 = vrot.slane %v410, %v425
        %v427 = vmul.f32 %v426, %v414
        %v428 = vmul.f32 %v426, %v415
        %v429 = vmul.f32 %v426, %v416
        %v430 = vmul.f32 %v426, %v417
        %v431 = vlaneseq
        %v432 = vshrl.u32 %v431, 7
        %v433 = vsub.s32 1, %v432
        %v434 = vrot.slane %v410, %v433
        %v435 = vmul.f32 %v434, %v414
        %v436 = vmul.f32 %v434, %v415
        %v437 = vmul.f32 %v434, %v416
        %v438 = vmul.f32 %v434, %v417
        %vm443 = vcmask 1046528
        %v444 = vrot.slane %v435, 1
        %v445 = vrot.slane %v436, 1
        %v446 = vsel %vm443, %v444, %v445
        %v447 = vrot.slane %v437, 1
        %v448 = vsel %vm443, %v445, %v447
        %v449 = vrot.slane %v438, 1
        %v450 = vsel %vm443, %v447, %v449
        %v451 = vsel %vm443, %v449, %v444
        %v456 = vadd.f32 %v427, %v446
        %v457 = vadd.f32 %v428, %v448
        %v458 = vadd.f32 %v429, %v450
        %v459 = vadd.f32 %v430, %v451
        %v460 = vlaneseq
        %v461 = vshrl.u32 %v460, 7
        %v462 = vsub.s32 2, %v461
        %v463 = vrot.slane %v410, %v462
        %v464 = vmul.f32 %v463, %v414
        %v465 = vmul.f32 %v463, %v415
        %v466 = vmul.f32 %v463, %v416
        %v467 = vmul.f32 %v463, %v417
        %vm472 = vcmask 1045504
        %v473 = vrot.slane %v464, 2
        %v474 = vrot.slane %v465, 2
        %v475 = vsel %vm472, %v473, %v474
        %v476 = vrot.slane %v466, 2
        %v477 = vsel %vm472, %v474, %v476
        %v478 = vrot.slane %v467, 2
        %v479 = vsel %vm472, %v476, %v478
        %v480 = vsel %vm472, %v478, %v473
        %v485 = vadd.f32 %v456, %v475
        %v486 = vadd.f32 %v457, %v477
        %v487 = vadd.f32 %v458, %v479
        %v488 = vadd.f32 %v459, %v480
        %v489 = vlaneseq
        %v490 = vshrl.u32 %v489, 7
        %v491 = vsub.s32 3, %v490
        %v492 = vrot.slane %v410, %v491
        %v493 = vmul.f32 %v492, %v414
        %v494 = vmul.f32 %v492, %v415
        %v495 = vmul.f32 %v492, %v416
        %v496 = vmul.f32 %v492, %v417
        %vm501 = vcmask 1044480
        %v502 = vrot.slane %v493, 3
        %v503 = vrot.slane %v494, 3
        %v504 = vsel %vm501, %v502, %v503
        %v505 = vrot.slane %v495, 3
        %v506 = vsel %vm501, %v503, %v505
        %v507 = vrot.slane %v496, 3
        %v508 = vsel %vm501, %v505, %v507
        %v509 = vsel %vm501, %v507, %v502
        %v514 = vadd.f32 %v485, %v504
        %v515 = vadd.f32 %v486, %v506
        %v516 = vadd.f32 %v487, %v508
        %v517 = vadd.f32 %v488, %v509
        %v518 = vlaneseq
        %v519 = vshrl.u32 %v518, 7
        %v520 = vsub.s32 4, %v519
        %v521 = vrot.slane %v410, %v520
        %v522 = vmul.f32 %v521, %v414
        %v523 = vmul.f32 %v521, %v415
        %v524 = vmul.f32 %v521, %v416
        %v525 = vmul.f32 %v521, %v417
        %vm530 = vcmask 1043456
        %v531 = vrot.slane %v522, 4
        %v532 = vrot.slane %v523, 4
        %v533 = vsel %vm530, %v531, %v532
        %v534 = vrot.slane %v524, 4
        %v535 = vsel %vm530, %v532, %v534
        %v536 = vrot.slane %v525, 4
        %v537 = vsel %vm530, %v534, %v536
        %v538 = vsel %vm530, %v536, %v531
        %v543 = vadd.f32 %v514, %v533
        %v544 = vadd.f32 %v515, %v535
        %v545 = vadd.f32 %v516, %v537
        %v546 = vadd.f32 %v517, %v538
        %v547 = vlaneseq
        %v548 = vshrl.u32 %v547, 7
        %v549 = vsub.s32 5, %v548
        %v550 = vrot.slane %v410, %v549
        %v551 = vmul.f32 %v550, %v414
        %v552 = vmul.f32 %v550, %v415
        %v553 = vmul.f32 %v550, %v416
        %v554 = vmul.f32 %v550, %v417
        %vm559 = vcmask 1042432
        %v560 = vrot.slane %v551, 5
        %v561 = vrot.slane %v552, 5
        %v562 = vsel %vm559, %v560, %v561
        %v563 = vrot.slane %v553, 5
        %v564 = vsel %vm559, %v561, %v563
        %v565 = vrot.slane %v554, 5
        %v566 = vsel %vm559, %v563, %v565
        %v567 = vsel %vm559, %v565, %v560
        %v572 = vadd.f32 %v543, %v562
        %v573 = vadd.f32 %v544, %v564
        %v574 = vadd.f32 %v545, %v566
        %v575 = vadd.f32 %v546, %v567
        %v576 = vlaneseq
        %v577 = vshrl.u32 %v576, 7
        %v578 = vsub.s32 6, %v577
        %v579 = vrot.slane %v410, %v578
        %v580 = vmul.f32 %v579, %v414
        %v581 = vmul.f32 %v579, %v415
        %v582 = vmul.f32 %v579, %v416
        %v583 = vmul.f32 %v579, %v417
        %vm588 = vcmask 1041408
        %v589 = vrot.slane %v580, 6
        %v590 = vrot.slane %v581, 6
        %v591 = vsel %vm588, %v589, %v590
        %v592 = vrot.slane %v582, 6
        %v593 = vsel %vm588, %v590, %v592
        %v594 = vrot.slane %v583, 6
        %v595 = vsel %vm588, %v592, %v594
        %v596 = vsel %vm588, %v594, %v589
        %v601 = vadd.f32 %v572, %v591
        %v602 = vadd.f32 %v573, %v593
        %v603 = vadd.f32 %v574, %v595
        %v604 = vadd.f32 %v575, %v596
        %v605 = vlaneseq
        %v606 = vshrl.u32 %v605, 7
        %v607 = vsub.s32 7, %v606
        %v608 = vrot.slane %v410, %v607
        %v609 = vmul.f32 %v608, %v414
        %v610 = vmul.f32 %v608, %v415
        %v611 = vmul.f32 %v608, %v416
        %v612 = vmul.f32 %v608, %v417
        %vm617 = vcmask 1040384
        %v618 = vrot.slane %v609, 7
        %v619 = vrot.slane %v610, 7
        %v620 = vsel %vm617, %v618, %v619
        %v621 = vrot.slane %v611, 7
        %v622 = vsel %vm617, %v619, %v621
        %v623 = vrot.slane %v612, 7
        %v624 = vsel %vm617, %v621, %v623
        %v625 = vsel %vm617, %v623, %v618
        %v630 = vadd.f32 %v601, %v620
        %v631 = vadd.f32 %v602, %v622
        %v632 = vadd.f32 %v603, %v624
        %v633 = vadd.f32 %v604, %v625
        %v634 = vlaneseq
        %v635 = vshrl.u32 %v634, 7
        %v636 = vsub.s32 0, %v635
        %v637 = vrot.slane %v411, %v636
        %v638 = vmul.f32 %v637, %v415
        %v639 = vmul.f32 %v637, %v416
        %v640 = vmul.f32 %v637, %v417
        %v641 = vmul.f32 %v637, %v414
        %v642 = vadd.f32 %v630, %v638
        %v643 = vadd.f32 %v631, %v639
        %v644 = vadd.f32 %v632, %v640
        %v645 = vadd.f32 %v633, %v641
        %v646 = vlaneseq
        %v647 = vshrl.u32 %v646, 7
        %v648 = vsub.s32 1, %v647
        %v649 = vrot.slane %v411, %v648
        %v650 = vmul.f32 %v649, %v415
        %v651 = vmul.f32 %v649, %v416
        %v652 = vmul.f32 %v649, %v417
        %v653 = vmul.f32 %v649, %v414
        %v658 = vrot.slane %v650, 1
        %v659 = vrot.slane %v651, 1
        %v660 = vsel %vm443, %v658, %v659
        %v661 = vrot.slane %v652, 1
        %v662 = vsel %vm443, %v659, %v661
        %v663 = vrot.slane %v653, 1
        %v664 = vsel %vm443, %v661, %v663
        %v665 = vsel %vm443, %v663, %v658
        %v670 = vadd.f32 %v642, %v660
        %v671 = vadd.f32 %v643, %v662
        %v672 = vadd.f32 %v644, %v664
        %v673 = vadd.f32 %v645, %v665
        %v674 = vlaneseq
        %v675 = vshrl.u32 %v674, 7
        %v676 = vsub.s32 2, %v675
        %v677 = vrot.slane %v411, %v676
        %v678 = vmul.f32 %v677, %v415
        %v679 = vmul.f32 %v677, %v416
        %v680 = vmul.f32 %v677, %v417
        %v681 = vmul.f32 %v677, %v414
        %v686 = vrot.slane %v678, 2
        %v687 = vrot.slane %v679, 2
        %v688 = vsel %vm472, %v686, %v687
        %v689 = vrot.slane %v680, 2
        %v690 = vsel %vm472, %v687, %v689
        %v691 = vrot.slane %v681, 2
        %v692 = vsel %vm472, %v689, %v691
        %v693 = vsel %vm472, %v691, %v686
        %v698 = vadd.f32 %v670, %v688
        %v699 = vadd.f32 %v671, %v690
        %v700 = vadd.f32 %v672, %v692
        %v701 = vadd.f32 %v673, %v693
        %v702 = vlaneseq
        %v703 = vshrl.u32 %v702, 7
        %v704 = vsub.s32 3, %v703
        %v705 = vrot.slane %v411, %v704
        %v706 = vmul.f32 %v705, %v415
        %v707 = vmul.f32 %v705, %v416
        %v708 = vmul.f32 %v705, %v417
        %v709 = vmul.f32 %v705, %v414
        %v714 = vrot.slane %v706, 3
        %v715 = vrot.slane %v707, 3
        %v716 = vsel %vm501, %v714, %v715
        %v717 = vrot.slane %v708, 3
        %v718 = vsel %vm501, %v715, %v717
        %v719 = vrot.slane %v709, 3
        %v720 = vsel %vm501, %v717, %v719
        %v721 = vsel %vm501, %v719, %v714
        %v726 = vadd.f32 %v698, %v716
        %v727 = vadd.f32 %v699, %v718
        %v728 = vadd.f32 %v700, %v720
        %v729 = vadd.f32 %v701, %v721
        %v730 = vlaneseq
        %v731 = vshrl.u32 %v730, 7
        %v732 = vsub.s32 4, %v731
        %v733 = vrot.slane %v411, %v732
        %v734 = vmul.f32 %v733, %v415
        %v735 = vmul.f32 %v733, %v416
        %v736 = vmul.f32 %v733, %v417
        %v737 = vmul.f32 %v733, %v414
        %v742 = vrot.slane %v734, 4
        %v743 = vrot.slane %v735, 4
        %v744 = vsel %vm530, %v742, %v743
        %v745 = vrot.slane %v736, 4
        %v746 = vsel %vm530, %v743, %v745
        %v747 = vrot.slane %v737, 4
        %v748 = vsel %vm530, %v745, %v747
        %v749 = vsel %vm530, %v747, %v742
        %v754 = vadd.f32 %v726, %v744
        %v755 = vadd.f32 %v727, %v746
        %v756 = vadd.f32 %v728, %v748
        %v757 = vadd.f32 %v729, %v749
        %v758 = vlaneseq
        %v759 = vshrl.u32 %v758, 7
        %v760 = vsub.s32 5, %v759
        %v761 = vrot.slane %v411, %v760
        %v762 = vmul.f32 %v761, %v415
        %v763 = vmul.f32 %v761, %v416
        %v764 = vmul.f32 %v761, %v417
        %v765 = vmul.f32 %v761, %v414
        %v770 = vrot.slane %v762, 5
        %v771 = vrot.slane %v763, 5
        %v772 = vsel %vm559, %v770, %v771
        %v773 = vrot.slane %v764, 5
        %v774 = vsel %vm559, %v771, %v773
        %v775 = vrot.slane %v765, 5
        %v776 = vsel %vm559, %v773, %v775
        %v777 = vsel %vm559, %v775, %v770
        %v782 = vadd.f32 %v754, %v772
        %v783 = vadd.f32 %v755, %v774
        %v784 = vadd.f32 %v756, %v776
        %v785 = vadd.f32 %v757, %v777
        %v786 = vlaneseq
        %v787 = vshrl.u32 %v786, 7
        %v788 = vsub.s32 6, %v787
        %v789 = vrot.slane %v411, %v788
        %v790 = vmul.f32 %v789, %v415
        %v791 = vmul.f32 %v789, %v416
        %v792 = vmul.f32 %v789, %v417
        %v793 = vmul.f32 %v789, %v414
        %v798 = vrot.slane %v790, 6
        %v799 = vrot.slane %v791, 6
        %v800 = vsel %vm588, %v798, %v799
        %v801 = vrot.slane %v792, 6
        %v802 = vsel %vm588, %v799, %v801
        %v803 = vrot.slane %v793, 6
        %v804 = vsel %vm588, %v801, %v803
        %v805 = vsel %vm588, %v803, %v798
        %v810 = vadd.f32 %v782, %v800
        %v811 = vadd.f32 %v783, %v802
        %v812 = vadd.f32 %v784, %v804
        %v813 = vadd.f32 %v785, %v805
        %v814 = vlaneseq
        %v815 = vshrl.u32 %v814, 7
        %v816 = vsub.s32 7, %v815
        %v817 = vrot.slane %v411, %v816
        %v818 = vmul.f32 %v817, %v415
        %v819 = vmul.f32 %v817, %v416
        %v820 = vmul.f32 %v817, %v417
        %v821 = vmul.f32 %v817, %v414
        %v826 = vrot.slane %v818, 7
        %v827 = vrot.slane %v819, 7
        %v828 = vsel %vm617, %v826, %v827
        %v829 = vrot.slane %v820, 7
        %v830 = vsel %vm617, %v827, %v829
        %v831 = vrot.slane %v821, 7
        %v832 = vsel %vm617, %v829, %v831
        %v833 = vsel %vm617, %v831, %v826
        %v838 = vadd.f32 %v810, %v828
        %v839 = vadd.f32 %v811, %v830
        %v840 = vadd.f32 %v812, %v832
        %v841 = vadd.f32 %v813, %v833
        %v842 = vlaneseq
        %v843 = vshrl.u32 %v842, 7
        %v844 = vsub.s32 0, %v843
        %v845 = vrot.slane %v412, %v844
        %v846 = vmul.f32 %v845, %v416
        %v847 = vmul.f32 %v845, %v417
        %v848 = vmul.f32 %v845, %v414
        %v849 = vmul.f32 %v845, %v415
        %v850 = vadd.f32 %v838, %v846
        %v851 = vadd.f32 %v839, %v847
        %v852 = vadd.f32 %v840, %v848
        %v853 = vadd.f32 %v841, %v849
        %v854 = vlaneseq
        %v855 = vshrl.u32 %v854, 7
        %v856 = vsub.s32 1, %v855
        %v857 = vrot.slane %v412, %v856
        %v858 = vmul.f32 %v857, %v416
        %v859 = vmul.f32 %v857, %v417
        %v860 = vmul.f32 %v857, %v414
        %v861 = vmul.f32 %v857, %v415
        %v866 = vrot.slane %v858, 1
        %v867 = vrot.slane %v859, 1
        %v868 = vsel %vm443, %v866, %v867
        %v869 = vrot.slane %v860, 1
        %v870 = vsel %vm443, %v867, %v869
        %v871 = vrot.slane %v861, 1
        %v872 = vsel %vm443, %v869, %v871
        %v873 = vsel %vm443, %v871, %v866
        %v878 = vadd.f32 %v850, %v868
        %v879 = vadd.f32 %v851, %v870
        %v880 = vadd.f32 %v852, %v872
        %v881 = vadd.f32 %v853, %v873
        %v882 = vlaneseq
        %v883 = vshrl.u32 %v882, 7
        %v884 = vsub.s32 2, %v883
        %v885 = vrot.slane %v412, %v884
        %v886 = vmul.f32 %v885, %v416
        %v887 = vmul.f32 %v885, %v417
        %v888 = vmul.f32 %v885, %v414
        %v889 = vmul.f32 %v885, %v415
        %v894 = vrot.slane %v886, 2
        %v895 = vrot.slane %v887, 2
        %v896 = vsel %vm472, %v894, %v895
        %v897 = vrot.slane %v888, 2
        %v898 = vsel %vm472, %v895, %v897
        %v899 = vrot.slane %v889, 2
        %v900 = vsel %vm472, %v897, %v899
        %v901 = vsel %vm472, %v899, %v894
        %v906 = vadd.f32 %v878, %v896
        %v907 = vadd.f32 %v879, %v898
        %v908 = vadd.f32 %v880, %v900
        %v909 = vadd.f32 %v881, %v901
        %v910 = vlaneseq
        %v911 = vshrl.u32 %v910, 7
        %v912 = vsub.s32 3, %v911
        %v913 = vrot.slane %v412, %v912
        %v914 = vmul.f32 %v913, %v416
        %v915 = vmul.f32 %v913, %v417
        %v916 = vmul.f32 %v913, %v414
        %v917 = vmul.f32 %v913, %v415
        %v922 = vrot.slane %v914, 3
        %v923 = vrot.slane %v915, 3
        %v924 = vsel %vm501, %v922, %v923
        %v925 = vrot.slane %v916, 3
        %v926 = vsel %vm501, %v923, %v925
        %v927 = vrot.slane %v917, 3
        %v928 = vsel %vm501, %v925, %v927
        %v929 = vsel %vm501, %v927, %v922
        %v934 = vadd.f32 %v906, %v924
        %v935 = vadd.f32 %v907, %v926
        %v936 = vadd.f32 %v908, %v928
        %v937 = vadd.f32 %v909, %v929
        %v938 = vlaneseq
        %v939 = vshrl.u32 %v938, 7
        %v940 = vsub.s32 4, %v939
        %v941 = vrot.slane %v412, %v940
        %v942 = vmul.f32 %v941, %v416
        %v943 = vmul.f32 %v941, %v417
        %v944 = vmul.f32 %v941, %v414
        %v945 = vmul.f32 %v941, %v415
        %v950 = vrot.slane %v942, 4
        %v951 = vrot.slane %v943, 4
        %v952 = vsel %vm530, %v950, %v951
        %v953 = vrot.slane %v944, 4
        %v954 = vsel %vm530, %v951, %v953
        %v955 = vrot.slane %v945, 4
        %v956 = vsel %vm530, %v953, %v955
        %v957 = vsel %vm530, %v955, %v950
        %v962 = vadd.f32 %v934, %v952
        %v963 = vadd.f32 %v935, %v954
        %v964 = vadd.f32 %v936, %v956
        %v965 = vadd.f32 %v937, %v957
        %v966 = vlaneseq
        %v967 = vshrl.u32 %v966, 7
        %v968 = vsub.s32 5, %v967
        %v969 = vrot.slane %v412, %v968
        %v970 = vmul.f32 %v969, %v416
        %v971 = vmul.f32 %v969, %v417
        %v972 = vmul.f32 %v969, %v414
        %v973 = vmul.f32 %v969, %v415
        %v978 = vrot.slane %v970, 5
        %v979 = vrot.slane %v971, 5
        %v980 = vsel %vm559, %v978, %v979
        %v981 = vrot.slane %v972, 5
        %v982 = vsel %vm559, %v979, %v981
        %v983 = vrot.slane %v973, 5
        %v984 = vsel %vm559, %v981, %v983
        %v985 = vsel %vm559, %v983, %v978
        %v990 = vadd.f32 %v962, %v980
        %v991 = vadd.f32 %v963, %v982
        %v992 = vadd.f32 %v964, %v984
        %v993 = vadd.f32 %v965, %v985
        %v994 = vlaneseq
        %v995 = vshrl.u32 %v994, 7
        %v996 = vsub.s32 6, %v995
        %v997 = vrot.slane %v412, %v996
        %v998 = vmul.f32 %v997, %v416
        %v999 = vmul.f32 %v997, %v417
        %v1000 = vmul.f32 %v997, %v414
        %v1001 = vmul.f32 %v997, %v415
        %v1006 = vrot.slane %v998, 6
        %v1007 = vrot.slane %v999, 6
        %v1008 = vsel %vm588, %v1006, %v1007
        %v1009 = vrot.slane %v1000, 6
        %v1010 = vsel %vm588, %v1007, %v1009
        %v1011 = vrot.slane %v1001, 6
        %v1012 = vsel %vm588, %v1009, %v1011
        %v1013 = vsel %vm588, %v1011, %v1006
        %v1018 = vadd.f32 %v990, %v1008
        %v1019 = vadd.f32 %v991, %v1010
        %v1020 = vadd.f32 %v992, %v1012
        %v1021 = vadd.f32 %v993, %v1013
        %v1022 = vlaneseq
        %v1023 = vshrl.u32 %v1022, 7
        %v1024 = vsub.s32 7, %v1023
        %v1025 = vrot.slane %v412, %v1024
        %v1026 = vmul.f32 %v1025, %v416
        %v1027 = vmul.f32 %v1025, %v417
        %v1028 = vmul.f32 %v1025, %v414
        %v1029 = vmul.f32 %v1025, %v415
        %v1034 = vrot.slane %v1026, 7
        %v1035 = vrot.slane %v1027, 7
        %v1036 = vsel %vm617, %v1034, %v1035
        %v1037 = vrot.slane %v1028, 7
        %v1038 = vsel %vm617, %v1035, %v1037
        %v1039 = vrot.slane %v1029, 7
        %v1040 = vsel %vm617, %v1037, %v1039
        %v1041 = vsel %vm617, %v1039, %v1034
        %v1046 = vadd.f32 %v1018, %v1036
        %v1047 = vadd.f32 %v1019, %v1038
        %v1048 = vadd.f32 %v1020, %v1040
        %v1049 = vadd.f32 %v1021, %v1041
        %v1050 = vlaneseq
        %v1051 = vshrl.u32 %v1050, 7
        %v1052 = vsub.s32 0, %v1051
        %v1053 = vrot.slane %v413, %v1052
        %v1054 = vmul.f32 %v1053, %v417
        %v1055 = vmul.f32 %v1053, %v414
        %v1056 = vmul.f32 %v1053, %v415
        %v1057 = vmul.f32 %v1053, %v416
        %v1058 = vadd.f32 %v1046, %v1054
        %v1059 = vadd.f32 %v1047, %v1055
        %v1060 = vadd.f32 %v1048, %v1056
        %v1061 = vadd.f32 %v1049, %v1057
        %v1062 = vlaneseq
        %v1063 = vshrl.u32 %v1062, 7
        %v1064 = vsub.s32 1, %v1063
        %v1065 = vrot.slane %v413, %v1064
        %v1066 = vmul.f32 %v1065, %v417
        %v1067 = vmul.f32 %v1065, %v414
        %v1068 = vmul.f32 %v1065, %v415
        %v1069 = vmul.f32 %v1065, %v416
        %v1074 = vrot.slane %v1066, 1
        %v1075 = vrot.slane %v1067, 1
        %v1076 = vsel %vm443, %v1074, %v1075
        %v1077 = vrot.slane %v1068, 1
        %v1078 = vsel %vm443, %v1075, %v1077
        %v1079 = vrot.slane %v1069, 1
        %v1080 = vsel %vm443, %v1077, %v1079
        %v1081 = vsel %vm443, %v1079, %v1074
        %v1086 = vadd.f32 %v1058, %v1076
        %v1087 = vadd.f32 %v1059, %v1078
        %v1088 = vadd.f32 %v1060, %v1080
        %v1089 = vadd.f32 %v1061, %v1081
        %v1090 = vlaneseq
        %v1091 = vshrl.u32 %v1090, 7
        %v1092 = vsub.s32 2, %v1091
        %v1093 = vrot.slane %v413, %v1092
        %v1094 = vmul.f32 %v1093, %v417
        %v1095 = vmul.f32 %v1093, %v414
        %v1096 = vmul.f32 %v1093, %v415
        %v1097 = vmul.f32 %v1093, %v416
        %v1102 = vrot.slane %v1094, 2
        %v1103 = vrot.slane %v1095, 2
        %v1104 = vsel %vm472, %v1102, %v1103
        %v1105 = vrot.slane %v1096, 2
        %v1106 = vsel %vm472, %v1103, %v1105
        %v1107 = vrot.slane %v1097, 2
        %v1108 = vsel %vm472, %v1105, %v1107
        %v1109 = vsel %vm472, %v1107, %v1102
        %v1114 = vadd.f32 %v1086, %v1104
        %v1115 = vadd.f32 %v1087, %v1106
        %v1116 = vadd.f32 %v1088, %v1108
        %v1117 = vadd.f32 %v1089, %v1109
        %v1118 = vlaneseq
        %v1119 = vshrl.u32 %v1118, 7
        %v1120 = vsub.s32 3, %v1119
        %v1121 = vrot.slane %v413, %v1120
        %v1122 = vmul.f32 %v1121, %v417
        %v1123 = vmul.f32 %v1121, %v414
        %v1124 = vmul.f32 %v1121, %v415
        %v1125 = vmul.f32 %v1121, %v416
        %v1130 = vrot.slane %v1122, 3
        %v1131 = vrot.slane %v1123, 3
        %v1132 = vsel %vm501, %v1130, %v1131
        %v1133 = vrot.slane %v1124, 3
        %v1134 = vsel %vm501, %v1131, %v1133
        %v1135 = vrot.slane %v1125, 3
        %v1136 = vsel %vm501, %v1133, %v1135
        %v1137 = vsel %vm501, %v1135, %v1130
        %v1142 = vadd.f32 %v1114, %v1132
        %v1143 = vadd.f32 %v1115, %v1134
        %v1144 = vadd.f32 %v1116, %v1136
        %v1145 = vadd.f32 %v1117, %v1137
        %v1146 = vlaneseq
        %v1147 = vshrl.u32 %v1146, 7
        %v1148 = vsub.s32 4, %v1147
        %v1149 = vrot.slane %v413, %v1148
        %v1150 = vmul.f32 %v1149, %v417
        %v1151 = vmul.f32 %v1149, %v414
        %v1152 = vmul.f32 %v1149, %v415
        %v1153 = vmul.f32 %v1149, %v416
        %v1158 = vrot.slane %v1150, 4
        %v1159 = vrot.slane %v1151, 4
        %v1160 = vsel %vm530, %v1158, %v1159
        %v1161 = vrot.slane %v1152, 4
        %v1162 = vsel %vm530, %v1159, %v1161
        %v1163 = vrot.slane %v1153, 4
        %v1164 = vsel %vm530, %v1161, %v1163
        %v1165 = vsel %vm530, %v1163, %v1158
        %v1170 = vadd.f32 %v1142, %v1160
        %v1171 = vadd.f32 %v1143, %v1162
        %v1172 = vadd.f32 %v1144, %v1164
        %v1173 = vadd.f32 %v1145, %v1165
        %v1174 = vlaneseq
        %v1175 = vshrl.u32 %v1174, 7
        %v1176 = vsub.s32 5, %v1175
        %v1177 = vrot.slane %v413, %v1176
        %v1178 = vmul.f32 %v1177, %v417
        %v1179 = vmul.f32 %v1177, %v414
        %v1180 = vmul.f32 %v1177, %v415
        %v1181 = vmul.f32 %v1177, %v416
        %v1186 = vrot.slane %v1178, 5
        %v1187 = vrot.slane %v1179, 5
        %v1188 = vsel %vm559, %v1186, %v1187
        %v1189 = vrot.slane %v1180, 5
        %v1190 = vsel %vm559, %v1187, %v1189
        %v1191 = vrot.slane %v1181, 5
        %v1192 = vsel %vm559, %v1189, %v1191
        %v1193 = vsel %vm559, %v1191, %v1186
        %v1198 = vadd.f32 %v1170, %v1188
        %v1199 = vadd.f32 %v1171, %v1190
        %v1200 = vadd.f32 %v1172, %v1192
        %v1201 = vadd.f32 %v1173, %v1193
        %v1202 = vlaneseq
        %v1203 = vshrl.u32 %v1202, 7
        %v1204 = vsub.s32 6, %v1203
        %v1205 = vrot.slane %v413, %v1204
        %v1206 = vmul.f32 %v1205, %v417
        %v1207 = vmul.f32 %v1205, %v414
        %v1208 = vmul.f32 %v1205, %v415
        %v1209 = vmul.f32 %v1205, %v416
        %v1214 = vrot.slane %v1206, 6
        %v1215 = vrot.slane %v1207, 6
        %v1216 = vsel %vm588, %v1214, %v1215
        %v1217 = vrot.slane %v1208, 6
        %v1218 = vsel %vm588, %v1215, %v1217
        %v1219 = vrot.slane %v1209, 6
        %v1220 = vsel %vm588, %v1217, %v1219
        %v1221 = vsel %vm588, %v1219, %v1214
        %v1226 = vadd.f32 %v1198, %v1216
        %v1227 = vadd.f32 %v1199, %v1218
        %v1228 = vadd.f32 %v1200, %v1220
        %v1229 = vadd.f32 %v1201, %v1221
        %v1230 = vlaneseq
        %v1231 = vshrl.u32 %v1230, 7
        %v1232 = vsub.s32 7, %v1231
        %v1233 = vrot.slane %v413, %v1232
        %v1234 = vmul.f32 %v1233, %v417
        %v1235 = vmul.f32 %v1233, %v414
        %v1236 = vmul.f32 %v1233, %v415
        %v1237 = vmul.f32 %v1233, %v416
        %v1242 = vrot.slane %v1234, 7
        %v1243 = vrot.slane %v1235, 7
        %v1244 = vsel %vm617, %v1242, %v1243
        %v1245 = vrot.slane %v1236, 7
        %v1246 = vsel %vm617, %v1243, %v1245
        %v1247 = vrot.slane %v1237, 7
        %v1248 = vsel %vm617, %v1245, %v1247
        %v1249 = vsel %vm617, %v1247, %v1242
        %v1254 = vadd.f32 %v1226, %v1244
        %v1255 = vadd.f32 %v1227, %v1246
        %v1256 = vadd.f32 %v1228, %v1248
        %v1257 = vadd.f32 %v1229, %v1249
        %v1258 = vmul.f32 %v418, %v1254
        %v1259 = vmul.f32 %v419, %v1255
        %v1260 = vmul.f32 %v420, %v1256
        %v1261 = vmul.f32 %v421, %v1257
        %v1262 = vadd.f32 %v1258, %v1259
        %v1263 = vadd.f32 %v1262, %v1260
        %v1264 = vadd.f32 %v1263, %v1261
        %v1265 = vrot.slane %v1264, 4
        %v1266 = vadd.f32 %v1264, %v1265
        %v1267 = vrot.slane %v1266, 2
        %v1268 = vadd.f32 %v1266, %v1267
        %v1269 = vrot.slane %v1268, 1
        %v1270 = vadd.f32 %v1268, %v1269
        %1271 = vst [vmem:[%s387] sm:$0x1] %v1270
        %v1272 = vsub.f32 0.0, %v1270
        %v1273 = vxor.u32 %v1272, 2147483648
        %v1274 = vmul.f32 %v1273, 1.442695
        %v1275 = vpow.pop %v1274
        %v1276 = vadd.f32 %v1275, 1.0
        %v1277 = vrcp.pop %v1276
        %v1278 = vmul.f32 1.0, %v1277
        %v1279 = vmul.f32 %v422, %v1278
        %v1280 = vsub.f32 0.0, %v1279
        %1281 = vst [vmem:[%s399] sm:$0x1] %v1280
        %v1283 = vlaneseq
        %v1284 = vshrl.u32 %v1283, 7
        %v1285 = vsub.s32 0, %v1284
        %v1286 = vrot.slane %v1280, %v1285
        %v1288 = vmul.f32 %v1286, %v1254
        %v1289 = vmul.f32 %v1286, %v1255
        %v1290 = vmul.f32 %v1286, %v1256
        %v1291 = vmul.f32 %v1286, %v1257
        %1292 = vst [vmem:[%s406] sm:$0xff] %v1288
        %1293 = vst [vmem:[%s406 + $0x8] sm:$0xff] %v1289
        %1294 = vst [vmem:[%s406 + $0x10] sm:$0xff] %v1290
        %1295 = vst [vmem:[%s406 + $0x18] sm:$0xff] %v1291
        %v1296 = vsub.f32 0.0, %v422
        %v1297 = vmul.f32 %v1296, %v1270
        %v1298 = vmax.f32 %v1297, 0.0
        %v1299 = vand.u32 2147483647, %v1297
        %v1300 = vsub.f32 0.0, %v1299
        %v1301 = vmul.f32 %v1300, 1.442695
        %v1302 = vpow.pop %v1301
        %v1303 = vadd.f32 %v1302, 1.0
        %v1304 = vlog2.pop %v1303
        %v1305 = vmul.f32 %v1304, 0.6931472
        %v1306 = vmul.f32 -0.5, %v1302
        %v1307 = vadd.f32 %v1306, 1.0
        %v1308 = vmul.f32 %v1307, %v1302
        %v1309 = vand.u32 2147483647, %v1302
        %vm1310 = vcmp.lt.f32.partialorder %v1309, 0.0004427343
        %v1311 = vsel %vm1310, %v1308, %v1305
        %v1312 = vadd.f32 %v1298, %v1311
        %1313 = vst [vmem:[%s393] sm:$0x1] %v1312
        %s1314 = sand.u32 %s146, 1
        %s1315 = scalar_lea.sflag [#allocation4], %s1314
        %s1316 = sand.u32 %s146, 1
        %s1317 = scalar_lea.vmem [#allocation8], %s1316
        %s1318 = sand.u32 %s34, 1
        %s1319 = scalar_lea.sflag [#allocation10], %s1318
        %s1320 = sand.u32 %s172, 1
        %s1321 = scalar_lea.vmem [#allocation9], %s1320
        %s1322 = sand.u32 %s34, 1
        %s1323 = scalar_lea.sflag [#allocation10], %s1322
        %s1324 = sand.u32 %s198, 1
        %s1325 = scalar_lea.vmem [#allocation11], %s1324
        %s1326 = sand.u32 %s224, 1
        %s1327 = scalar_lea.sflag [#allocation13], %s1326
        %s1328 = sand.u32 %s224, 1
        %s1329 = smul.addr %s1328, 32
        %s1330 = scalar_lea.vmem [#allocation12], %s1329
        // Predicated region
        $region49: #{tpu_custom_call.1} parent=35 // pred_check
          %p1331 = pneg %p156
        $region50: #{tpu_custom_call.1} parent=35 // pred_check_branch
          %1333 = sbr.rel (%p1331) target = $region52
        $region51: #{tpu_custom_call.1} parent=35 // pred_region
          %s1335 = ssub.s32 16, 16
          %1336 = vsyncadd %s1315, %s1335
          %s1337 = smul.addr %s34, 16
          %s1338 = scalar_lea.hbm %s4, %s1337
          %s1340 = sshll.u32 %s1317, 4
          %s1341 = int_to_ptr.vmem [resolvable:$true] %s1340
          %1343 = dma.vmem_to_hbm [thread:$0]  %s1341, 16, %s1338, %s1315
        $region52: #{tpu_custom_call.1} parent=35 // pred_fallthru
          _
        // Predicated region
        $region53: #{tpu_custom_call.1} parent=35 // pred_check
          %p1344 = pneg %p182
        $region54: #{tpu_custom_call.1} parent=35 // pred_check_branch
          %1346 = sbr.rel (%p1344) target = $region56
        $region55: #{tpu_custom_call.1} parent=35 // pred_region
          %s1348 = ssub.s32 16, 16
          %1349 = vsyncadd %s1319, %s1348
          %s1350 = smul.addr %s34, 16
          %s1351 = scalar_lea.hbm %s5, %s1350
          %s1353 = sshll.u32 %s1321, 4
          %s1354 = int_to_ptr.vmem [resolvable:$true] %s1353
          %1356 = dma.vmem_to_hbm [thread:$0]  %s1354, 16, %s1351, %s1319
        $region56: #{tpu_custom_call.1} parent=35 // pred_fallthru
          _
        // Predicated region
        $region57: #{tpu_custom_call.1} parent=35 // pred_check
          %p1357 = pneg %p208
        $region58: #{tpu_custom_call.1} parent=35 // pred_check_branch
          %1359 = sbr.rel (%p1357) target = $region60
        $region59: #{tpu_custom_call.1} parent=35 // pred_region
          %s1361 = ssub.s32 16, 16
          %1362 = vsyncadd %s1323, %s1361
          %s1363 = smul.addr %s34, 16
          %s1364 = scalar_lea.hbm %s6, %s1363
          %s1366 = sshll.u32 %s1325, 4
          %s1367 = int_to_ptr.vmem [resolvable:$true] %s1366
          %1369 = dma.vmem_to_hbm [thread:$0]  %s1367, 16, %s1364, %s1323
        $region60: #{tpu_custom_call.1} parent=35 // pred_fallthru
          _
        // Predicated region
        $region61: #{tpu_custom_call.1} parent=35 // pred_check
          %p1370 = pneg %p234
        $region62: #{tpu_custom_call.1} parent=35 // pred_check_branch
          %1372 = sbr.rel (%p1370) target = $region64
        $region63: #{tpu_custom_call.1} parent=35 // pred_region
          %s1374 = ssub.s32 512, 512
          %1375 = vsyncadd %s1327, %s1374
          %s1376 = smul.addr %s34, 128
          %s1377 = scalar_lea.hbm %s7, %s1376
          %s1378 = sshll.u32 %s1330, 4
          %s1379 = int_to_ptr.vmem [resolvable:$true] %s1378
          %1384 = dma.vmem_to_hbm [thread:$0]  %s1379, 512, %s1377, %s1327, 128, 256, 8
        $region64: #{tpu_custom_call.1} parent=35 // pred_fallthru
          _
      $region36: #{tpu_custom_call.1} parent=5 // pred_fallthru
        _
      %p1385 = scmp.le.s32.totalorder 2, %s29
      // Predicated region
      $region65: #{tpu_custom_call.1} parent=5 // pred_check
        %p1386 = pneg %p1385
      $region66: #{tpu_custom_call.1} parent=5 // pred_check_branch
        %1388 = sbr.rel (%p1386) target = $region68
      $region67: #{tpu_custom_call.1} parent=5 // pred_region
        %s1389 = ssub.s32 %s29, 2
        // Predicated region
        $region69: #{tpu_custom_call.1} parent=67 // pred_check
          %p1390 = pneg %p162
        $region70: #{tpu_custom_call.1} parent=67 // pred_check_branch
          %1392 = sbr.rel (%p1390) target = $region72
        $region71: #{tpu_custom_call.1} parent=67 // pred_region
          %s1393 = sand.u32 %s147, 1
          %s1394 = scalar_lea.sflag [#allocation4], %s1393
          %s1395 = sand.u32 %s147, 1
          %s1396 = scalar_lea.vmem [#allocation8], %s1395
          %1397 = dma.done %s1394, 16
        $region72: #{tpu_custom_call.1} parent=67 // pred_fallthru
          _
        // Predicated region
        $region73: #{tpu_custom_call.1} parent=67 // pred_check
          %p1398 = pneg %p188
        $region74: #{tpu_custom_call.1} parent=67 // pred_check_branch
          %1400 = sbr.rel (%p1398) target = $region76
        $region75: #{tpu_custom_call.1} parent=67 // pred_region
          %s1401 = sand.u32 %s35, 1
          %s1402 = scalar_lea.sflag [#allocation10], %s1401
          %s1403 = sand.u32 %s173, 1
          %s1404 = scalar_lea.vmem [#allocation9], %s1403
          %1405 = dma.done %s1402, 16
        $region76: #{tpu_custom_call.1} parent=67 // pred_fallthru
          _
        // Predicated region
        $region77: #{tpu_custom_call.1} parent=67 // pred_check
          %p1406 = pneg %p214
        $region78: #{tpu_custom_call.1} parent=67 // pred_check_branch
          %1408 = sbr.rel (%p1406) target = $region80
        $region79: #{tpu_custom_call.1} parent=67 // pred_region
          %s1409 = sand.u32 %s35, 1
          %s1410 = scalar_lea.sflag [#allocation10], %s1409
          %s1411 = sand.u32 %s199, 1
          %s1412 = scalar_lea.vmem [#allocation11], %s1411
          %1413 = dma.done %s1410, 16
        $region80: #{tpu_custom_call.1} parent=67 // pred_fallthru
          _
        // Predicated region
        $region81: #{tpu_custom_call.1} parent=67 // pred_check
          %p1414 = pneg %p240
        $region82: #{tpu_custom_call.1} parent=67 // pred_check_branch
          %1416 = sbr.rel (%p1414) target = $region84
        $region83: #{tpu_custom_call.1} parent=67 // pred_region
          %s1417 = sand.u32 %s225, 1
          %s1418 = scalar_lea.sflag [#allocation13], %s1417
          %s1419 = sand.u32 %s225, 1
          %s1420 = smul.addr %s1419, 32
          %s1421 = scalar_lea.vmem [#allocation12], %s1420
          %1422 = dma.done %s1418, 512
        $region84: #{tpu_custom_call.1} parent=67 // pred_fallthru
          _
      $region68: #{tpu_custom_call.1} parent=5 // pred_fallthru
        _
    $region6: #{tpu_custom_call.1} parent=1 // loop_footer
      %s33 = sadd.s32 1, %s29
    $region7: #{tpu_custom_call.1} parent=1 // loop_footer_branch
      %28 = sbr.rel target = $region3
    $region8: #{tpu_custom_call.1} parent=1 // loop_exit
      _
    %1423 = vsyncpa [#allocation3], 1
    %s1424 = scalar_lea.sflag [#allocation3], 1
    %1425 = vsyncpa %s1424, 1
    %1426 = vsyncpa [#allocation6], 1
    %s1427 = scalar_lea.sflag [#allocation6], 1
    %1428 = vsyncpa %s1427, 1
    %1429 = vsyncpa [#allocation4], 1
    %s1430 = scalar_lea.sflag [#allocation4], 1
    %1431 = vsyncpa %s1430, 1
    %1432 = vsyncpa [#allocation10], 1
    %s1433 = scalar_lea.sflag [#allocation10], 1
    %1434 = vsyncpa %s1433, 1
    %1435 = vsyncpa [#allocation13], 1
    %s1436 = scalar_lea.sflag [#allocation13], 1
    %1437 = vsyncpa %s1436, 1

</llo_original>
